<compile_context>
chip_gen: v6e
topology: v6e:2x2x1
jax: 0.10.0
libtpu: 0.0.40
codegen_flags: <defaults>
</compile_context>

<pallas_src>
import functools

import jax
import jax.numpy as jnp
from jax.experimental import pallas as pl
from jax.experimental.pallas import tpu as pltpu


def _pointer_kernel(sd_ref, x_ref, h0_ref,
                    wi_ref, wh_ref, bi_ref, bh_ref,
                    wa_sd_ref, wa_h_ref, va_ref,
                    wp_s_ref, wp_c_ref, vp_ref,
                    e_ref, et_ref,
                    probs_ref, hh_ref,
                    *, hidden_size, matmul_dtype):
    """One grid step == one block of BB batch elements folded into L = BB*S lanes."""
    f32 = jnp.float32
    H = hidden_size

    def mxu(a, b):  # MXU matmul with f32 accumulation; operands in matmul_dtype.
        return jnp.dot(a.astype(matmul_dtype), b.astype(matmul_dtype),
                       preferred_element_type=f32)

    sd = sd_ref[...]                 # (2H, L)  [static; dynamic], batch folded into lanes
    st = sd[:H, :]                   # (H, L)   static rows (8-aligned sublane slice)
    x = x_ref[...]                   # (H, BB)  GRU input (decoder embedding), pre-transposed
    h0 = h0_ref[...]                 # (H, BB)  previous hidden state, pre-transposed
    E = e_ref[...]                   # (BB, L)  one-hot segment broadcast matrix
    ET = et_ref[...]                 # (L, BB)  one-hot segment reduce matrix

    # ---- GRU cell, single timestep; all 3 gates in one fused matmul per operand ----
    gi = mxu(wi_ref[...], x) + bi_ref[...]          # (3H, BB)
    gh = mxu(wh_ref[...], h0) + bh_ref[...]         # (3H, BB)
    r = jax.nn.sigmoid(gi[:H] + gh[:H])
    z = jax.nn.sigmoid(gi[H:2 * H] + gh[H:2 * H])
    n = jnp.tanh(gi[2 * H:] + r * gh[2 * H:])
    h_new = (1.0 - z) * n + z * h0                  # (H, BB) == rnn_out^T == new last_hh^T
    hh_ref[...] = h_new.astype(hh_ref.dtype)        # stored (H, B); transposed in XLA

    # ---- Attention logits: one (H,2H)@(2H,L) matmul + per-batch decoder bias via E ----
    bias_a = mxu(wa_h_ref[...], h_new)                          # (H, BB), once per block
    ua = jnp.tanh(mxu(wa_sd_ref[...], sd) + mxu(bias_a, E))     # (H, L)
    alog = jnp.sum(va_ref[...] * ua, axis=0, keepdims=True)     # (1, L)  VPU mul + sublane reduce

    # ---- Per-batch softmax + context, reduced straight to the (·, BB) domain ----
    # Block-wide max shift is softmax-invariant and prevents exp overflow
    # (logits are tanh-bounded by sum|v_a|).
    ex = jnp.exp(alog - jnp.max(alog, axis=1, keepdims=True))   # (1, L)
    denom_b = mxu(ex, ET)                                       # (1, BB) per-batch sums
    raw_b = mxu(st * ex, ET)                                    # (H, BB) unnormalized context
    ctx_b = raw_b * (1.0 / denom_b)                             # exact normalize (BB elems)

    # ---- Pointer logits: project context per-batch, then broadcast via E ----
    bias_p = mxu(wp_c_ref[...], ctx_b)                          # (H, BB)
    up = jnp.tanh(mxu(wp_s_ref[...], st) + mxu(bias_p, E))      # (H, L)
    probs_ref[...] = jnp.sum(vp_ref[...] * up, axis=0,
                             keepdims=True).astype(probs_ref.dtype)   # lane-packed (1, L)


def _choose_block_batch(B, S, max_lanes):
    """Batches per grid step.  Single block when everything fits (blocks == full
    arrays, so no (8,128) constraint).  Otherwise BB must be a multiple of 128 so
    the (H, BB) x/h0/hh blocks and (H, BB*S) folded blocks are lane-aligned."""
    if B * S <= max_lanes:
        return B
    best = None
    for bb in range(128, B, 128):
        if B % bb == 0 and bb * S <= max_lanes:
            best = bb
    if best is None:
        # TODO(synk): no legal lane-aligned split; fall back to a single block
        # (may need a larger vmem_limit_bytes at production sizes).
        return B
    return best


def _prep_params(params, H, matmul_dtype):
    f32 = jnp.float32
    Wi = params["W_ih"].astype(matmul_dtype)                  # (3H, H) GRU r/z/n (input)
    Wh = params["W_hh"].astype(matmul_dtype)                  # (3H, H) GRU r/z/n (hidden)
    bi = params["b_ih"].reshape(3 * H, 1).astype(f32)
    bh = params["b_hh"].reshape(3 * H, 1).astype(f32)
    Wa = params["attn_W"][0]                                  # (H, 3H) = [Ws | Wd | Wh]
    Wa_sd = Wa[:, :2 * H].astype(matmul_dtype)                # (H, 2H)
    Wa_h = Wa[:, 2 * H:].astype(matmul_dtype)                 # (H, H)
    va = params["attn_v"].reshape(H, 1).astype(f32)
    Wp = params["W"][0]                                       # (H, 2H) = [Ws | Wctx]
    Wp_s = Wp[:, :H].astype(matmul_dtype)
    Wp_c = Wp[:, H:].astype(matmul_dtype)
    vp = params["v"].reshape(H, 1).astype(f32)
    return Wi, Wh, bi, bh, Wa_sd, Wa_h, va, Wp_s, Wp_c, vp


def _vmem_bytes_estimate(H, BB, LB, mm_bytes):
    f4 = 4
    per_step = (
        2 * H * LB * mm_bytes            # sd block
        + 2 * H * BB * f4                # x, h0
        + 6 * H * H * mm_bytes + 6 * H * f4        # GRU weights + biases
        + (2 * H * H + 3 * H * H) * mm_bytes + 2 * H * f4   # attn/pointer weights + v
        + 2 * BB * LB * f4               # E, E^T
        + LB * f4 + H * BB * f4          # outputs
    )
    return 2 * per_step                  # default double-buffering


@functools.partial(jax.jit, static_argnames=("matmul_dtype", "max_lanes"))
def pointer_forward(static_hidden, dynamic_hidden, decoder_hidden, last_hh, params,
                    matmul_dtype=jnp.float32, max_lanes=2048):
    """static/dynamic: (B,H,S); decoder_hidden: (B,H,1); last_hh: (1,B,H).
    Returns (probs (B,S), new_last_hh (1,B,H)).  On v6e/v7x pass
    matmul_dtype=jnp.bfloat16 for MXU-native operands (hh stays f32)."""
    B, H, S = static_hidden.shape
    assert H % 8 == 0, "hidden_size must be a multiple of 8 for aligned gate slices"
    f32 = jnp.float32
    BB = _choose_block_batch(B, S, max_lanes)
    nblk = B // BB
    LB = BB * S

    # Wrapper-side layout plumbing: fold batch into the lane axis, stack static/dynamic.
    sd = jnp.concatenate(
        [static_hidden.astype(matmul_dtype).transpose(1, 0, 2).reshape(H, B * S),
         dynamic_hidden.astype(matmul_dtype).transpose(1, 0, 2).reshape(H, B * S)],
        axis=0)                                                    # (2H, B*S)
    x = decoder_hidden.astype(f32).reshape(B, H).T                 # (H, B)
    h0 = last_hh.astype(f32).reshape(B, H).T                       # (H, B)
    Wi, Wh, bi, bh, Wa_sd, Wa_h, va, Wp_s, Wp_c, vp = _prep_params(params, H, matmul_dtype)

    # Small per-block segment matrices (shared across grid blocks); replaces the old
    # (LB, LB) block-diagonal constant.
    E = jnp.repeat(jnp.eye(BB, dtype=f32), S, axis=1)              # (BB, LB) broadcast
    ET = E.T                                                       # (LB, BB) reduce

    grid_spec = pltpu.PrefetchScalarGridSpec(
        num_scalar_prefetch=0,
        grid=(nblk,),
        in_specs=[
            pl.BlockSpec((2 * H, LB), lambda i: (0, i)),       # [static; dynamic] folded
            pl.BlockSpec((H, BB), lambda i: (0, i)),           # GRU input x (H, B)
            pl.BlockSpec((H, BB), lambda i: (0, i)),           # previous hidden (H, B)
            pl.BlockSpec((3 * H, H), lambda i: (0, 0)),        # GRU W_ih (fused gates)
            pl.BlockSpec((3 * H, H), lambda i: (0, 0)),        # GRU W_hh (fused gates)
            pl.BlockSpec((3 * H, 1), lambda i: (0, 0)),        # GRU b_ih
            pl.BlockSpec((3 * H, 1), lambda i: (0, 0)),        # GRU b_hh
            pl.BlockSpec((H, 2 * H), lambda i: (0, 0)),        # attention [Ws | Wd]
            pl.BlockSpec((H, H), lambda i: (0, 0)),            # attention Wh
            pl.BlockSpec((H, 1), lambda i: (0, 0)),            # attention v
            pl.BlockSpec((H, H), lambda i: (0, 0)),            # pointer Ws
            pl.BlockSpec((H, H), lambda i: (0, 0)),            # pointer Wctx
            pl.BlockSpec((H, 1), lambda i: (0, 0)),            # pointer v
            pl.BlockSpec((BB, LB), lambda i: (0, 0)),          # segment broadcast E
            pl.BlockSpec((LB, BB), lambda i: (0, 0)),          # segment reduce E^T
        ],
        out_specs=[
            pl.BlockSpec((1, LB), lambda i: (0, i)),           # pointer logits, lane-packed
            pl.BlockSpec((H, BB), lambda i: (0, i)),           # new last_hh (H, B), f32
        ],
    )

    # Explicit VMEM budget only when the block footprint exceeds the default scoped
    # limit (v7x: 64 MiB physical / 32 MiB default; v5e: 16 MiB default).
    est = _vmem_bytes_estimate(H, BB, LB, jnp.dtype(matmul_dtype).itemsize)
    cp_kwargs = dict(dimension_semantics=("parallel",))
    if est > (30 << 20):
        cp_kwargs["vmem_limit_bytes"] = int(min(est + (8 << 20), 64 << 20))

    kernel = functools.partial(_pointer_kernel, hidden_size=H, matmul_dtype=matmul_dtype)
    probs_fold, hh_new = pl.pallas_call(
        kernel,
        out_shape=(jax.ShapeDtypeStruct((1, B * S), static_hidden.dtype),
                   jax.ShapeDtypeStruct((H, B), jnp.float32)),
        grid_spec=grid_spec,
        compiler_params=pltpu.CompilerParams(**cp_kwargs),
    )(sd, x, h0, Wi, Wh, bi, bh, Wa_sd, Wa_h, va, Wp_s, Wp_c, vp, E, ET)

    probs = probs_fold.reshape(B, S)              # lane index l = b*S + s
    return probs, hh_new.T[None, :, :]            # (1, B, H), f32


def _reference(static_hidden, dynamic_hidden, decoder_hidden, last_hh, p):
    """Pure-JAX reference of the PyTorch Pointer.forward (inference)."""
    B, H, S = static_hidden.shape
    x = decoder_hidden.reshape(B, H)
    h0 = last_hh.reshape(B, H)
    gi = x @ p["W_ih"].T + p["b_ih"]
    gh = h0 @ p["W_hh"].T + p["b_hh"]
    ir, iz, inn = jnp.split(gi, 3, axis=1)
    hr, hz, hn = jnp.split(gh, 3, axis=1)
    r = jax.nn.sigmoid(ir + hr)
    z = jax.nn.sigmoid(iz + hz)
    n = jnp.tanh(inn + r * hn)
    h_new = (1.0 - z) * n + z * h0                                        # (B, H)
    # attention
    hidden = jnp.concatenate(
        [static_hidden, dynamic_hidden,
         jnp.broadcast_to(h_new[:, :, None], (B, H, S))], axis=1)         # (B, 3H, S)
    u = jnp.tanh(jnp.einsum("hk,bks->bhs", p["attn_W"][0], hidden))
    attn = jax.nn.softmax(jnp.einsum("oh,bhs->bos", p["attn_v"][0], u), axis=2)
    # pointer
    context = jnp.einsum("bos,bhs->boh", attn, static_hidden)             # (B, 1, H)
    context_b = jnp.broadcast_to(context.transpose(0, 2, 1), (B, H, S))
    energy = jnp.concatenate([static_hidden, context_b], axis=1)          # (B, 2H, S)
    up = jnp.tanh(jnp.einsum("hk,bks->bhs", p["W"][0], energy))
    probs = jnp.einsum("oh,bhs->bos", p["v"][0], up)[:, 0, :]             # (B, S)
    return probs, h_new.reshape(1, B, H)


if __name__ == "__main__":
    B, H, S = 2, 32, 8
    key = jax.random.PRNGKey(0)
    ks = jax.random.split(key, 12)

    static_hidden = jax.random.normal(ks[0], (B, H, S), dtype=jnp.float32)
    dynamic_hidden = jax.random.normal(ks[1], (B, H, S), dtype=jnp.float32)
    decoder_hidden = jax.random.normal(ks[2], (B, H, 1), dtype=jnp.float32)
    last_hh = jax.random.normal(ks[3], (1, B, H), dtype=jnp.float32)

    # Module declares zero-init v/W params and default-init GRU weights; use small
    # deterministic random values so the kernel is exercised non-trivially.
    params = {
        "W_ih": 0.3 * jax.random.normal(ks[4], (3 * H, H), dtype=jnp.float32),
        "W_hh": 0.3 * jax.random.normal(ks[5], (3 * H, H), dtype=jnp.float32),
        "b_ih": 0.1 * jax.random.normal(ks[6], (3 * H,), dtype=jnp.float32),
        "b_hh": 0.1 * jax.random.normal(ks[7], (3 * H,), dtype=jnp.float32),
        "attn_v": 0.1 * jax.random.normal(ks[8], (1, 1, H), dtype=jnp.float32),
        "attn_W": 0.1 * jax.random.normal(ks[9], (1, H, 3 * H), dtype=jnp.float32),
        "v": 0.1 * jax.random.normal(ks[10], (1, 1, H), dtype=jnp.float32),
        "W": 0.1 * jax.random.normal(ks[11], (1, H, 2 * H), dtype=jnp.float32),
    }

    probs, new_hh = pointer_forward(static_hidden, dynamic_hidden, decoder_hidden,
                                    last_hh, params)
    jax.block_until_ready((probs, new_hh))

    ref_probs, ref_hh = _reference(static_hidden, dynamic_hidden, decoder_hidden,
                                   last_hh, params)
    assert probs.shape == (B, S)
    assert new_hh.shape == (1, B, H)
    assert jnp.allclose(probs, ref_probs, atol=2e-4, rtol=2e-4)
    assert jnp.allclose(new_hh, ref_hh, atol=2e-4, rtol=2e-4)

    print("KERNEL_OK")
</pallas_src>

<mosaic_0001>
module attributes {stable_mosaic.version = 11 : i64} {
  func.func @_pointer_kernel(%arg0: i32, %arg1: memref<64x16xf32, #tpu.memory_space<vmem>>, %arg2: memref<32x2xf32, #tpu.memory_space<vmem>>, %arg3: memref<32x2xf32, #tpu.memory_space<vmem>>, %arg4: memref<96x32xf32, #tpu.memory_space<vmem>>, %arg5: memref<96x32xf32, #tpu.memory_space<vmem>>, %arg6: memref<96x1xf32, #tpu.memory_space<vmem>>, %arg7: memref<96x1xf32, #tpu.memory_space<vmem>>, %arg8: memref<32x64xf32, #tpu.memory_space<vmem>>, %arg9: memref<32x32xf32, #tpu.memory_space<vmem>>, %arg10: memref<32x1xf32, #tpu.memory_space<vmem>>, %arg11: memref<32x32xf32, #tpu.memory_space<vmem>>, %arg12: memref<32x32xf32, #tpu.memory_space<vmem>>, %arg13: memref<32x1xf32, #tpu.memory_space<vmem>>, %arg14: memref<2x16xf32, #tpu.memory_space<vmem>>, %arg15: memref<16x2xf32, #tpu.memory_space<vmem>>, %arg16: memref<1x16xf32, #tpu.memory_space<vmem>>, %arg17: memref<32x2xf32, #tpu.memory_space<vmem>>) attributes {dimension_semantics = [#tpu.dimension_semantics<parallel>], iteration_bounds = array<i64: 1>, scalar_prefetch = 0 : i64, scratch_operands = 0 : i64, tpu.core_type = #tpu.core_type<tc>, window_params = [{transform_indices = @transform_0, window_bounds = array<i64: 64, 16>}, {transform_indices = @transform_1, window_bounds = array<i64: 32, 2>}, {transform_indices = @transform_2, window_bounds = array<i64: 32, 2>}, {pipeline_mode = #tpu.pipeline_mode<synchronous>, transform_indices = @transform_3, window_bounds = array<i64: 96, 32>}, {pipeline_mode = #tpu.pipeline_mode<synchronous>, transform_indices = @transform_4, window_bounds = array<i64: 96, 32>}, {pipeline_mode = #tpu.pipeline_mode<synchronous>, transform_indices = @transform_5, window_bounds = array<i64: 96, 1>}, {pipeline_mode = #tpu.pipeline_mode<synchronous>, transform_indices = @transform_6, window_bounds = array<i64: 96, 1>}, {pipeline_mode = #tpu.pipeline_mode<synchronous>, transform_indices = @transform_7, window_bounds = array<i64: 32, 64>}, {pipeline_mode = #tpu.pipeline_mode<synchronous>, transform_indices = @transform_8, window_bounds = array<i64: 32, 32>}, {pipeline_mode = #tpu.pipeline_mode<synchronous>, transform_indices = @transform_9, window_bounds = array<i64: 32, 1>}, {pipeline_mode = #tpu.pipeline_mode<synchronous>, transform_indices = @transform_10, window_bounds = array<i64: 32, 32>}, {pipeline_mode = #tpu.pipeline_mode<synchronous>, transform_indices = @transform_11, window_bounds = array<i64: 32, 32>}, {pipeline_mode = #tpu.pipeline_mode<synchronous>, transform_indices = @transform_12, window_bounds = array<i64: 32, 1>}, {pipeline_mode = #tpu.pipeline_mode<synchronous>, transform_indices = @transform_13, window_bounds = array<i64: 2, 16>}, {pipeline_mode = #tpu.pipeline_mode<synchronous>, transform_indices = @transform_14, window_bounds = array<i64: 16, 2>}, {transform_indices = @transform_15, window_bounds = array<i64: 1, 16>}, {transform_indices = @transform_16, window_bounds = array<i64: 32, 2>}]} {
    %c0 = arith.constant 0 : index
    %c0_0 = arith.constant 0 : index
    %0 = vector.load %arg1[%c0, %c0_0] : memref<64x16xf32, #tpu.memory_space<vmem>>, vector<64x16xf32>
    %1 = vector.extract_strided_slice %0 {offsets = [0, 0], sizes = [32, 16], strides = [1, 1]} : vector<64x16xf32> to vector<32x16xf32>
    %c0_1 = arith.constant 0 : index
    %c0_2 = arith.constant 0 : index
    %2 = vector.load %arg2[%c0_1, %c0_2] : memref<32x2xf32, #tpu.memory_space<vmem>>, vector<32x2xf32>
    %c0_3 = arith.constant 0 : index
    %c0_4 = arith.constant 0 : index
    %3 = vector.load %arg3[%c0_3, %c0_4] : memref<32x2xf32, #tpu.memory_space<vmem>>, vector<32x2xf32>
    %c0_5 = arith.constant 0 : index
    %c0_6 = arith.constant 0 : index
    %4 = vector.load %arg14[%c0_5, %c0_6] : memref<2x16xf32, #tpu.memory_space<vmem>>, vector<2x16xf32>
    %c0_7 = arith.constant 0 : index
    %c0_8 = arith.constant 0 : index
    %5 = vector.load %arg15[%c0_7, %c0_8] : memref<16x2xf32, #tpu.memory_space<vmem>>, vector<16x2xf32>
    %c0_9 = arith.constant 0 : index
    %c0_10 = arith.constant 0 : index
    %6 = vector.load %arg4[%c0_9, %c0_10] : memref<96x32xf32, #tpu.memory_space<vmem>>, vector<96x32xf32>
    %cst = arith.constant dense<0.000000e+00> : vector<96x2xf32>
    %7 = tpu.matmul %6, %2, %cst {dimension_numbers = #tpu.dot_dimension_numbers<[1], [0], [0], [1], [0, 0, 1, 1], [], []>} : vector<96x32xf32>, vector<32x2xf32>, vector<96x2xf32> -> vector<96x2xf32>
    %c0_11 = arith.constant 0 : index
    %c0_12 = arith.constant 0 : index
    %8 = vector.load %arg6[%c0_11, %c0_12] : memref<96x1xf32, #tpu.memory_space<vmem>>, vector<96x1xf32>
    %9 = vector.broadcast %8 : vector<96x1xf32> to vector<96x2xf32>
    %10 = arith.addf %7, %9 : vector<96x2xf32>
    %c0_13 = arith.constant 0 : index
    %c0_14 = arith.constant 0 : index
    %11 = vector.load %arg5[%c0_13, %c0_14] : memref<96x32xf32, #tpu.memory_space<vmem>>, vector<96x32xf32>
    %cst_15 = arith.constant dense<0.000000e+00> : vector<96x2xf32>
    %12 = tpu.matmul %11, %3, %cst_15 {dimension_numbers = #tpu.dot_dimension_numbers<[1], [0], [0], [1], [0, 0, 1, 1], [], []>} : vector<96x32xf32>, vector<32x2xf32>, vector<96x2xf32> -> vector<96x2xf32>
    %c0_16 = arith.constant 0 : index
    %c0_17 = arith.constant 0 : index
    %13 = vector.load %arg7[%c0_16, %c0_17] : memref<96x1xf32, #tpu.memory_space<vmem>>, vector<96x1xf32>
    %14 = vector.broadcast %13 : vector<96x1xf32> to vector<96x2xf32>
    %15 = arith.addf %12, %14 : vector<96x2xf32>
    %16 = vector.extract_strided_slice %10 {offsets = [0, 0], sizes = [32, 2], strides = [1, 1]} : vector<96x2xf32> to vector<32x2xf32>
    %17 = vector.extract_strided_slice %15 {offsets = [0, 0], sizes = [32, 2], strides = [1, 1]} : vector<96x2xf32> to vector<32x2xf32>
    %18 = arith.addf %16, %17 : vector<32x2xf32>
    %19 = arith.negf %18 : vector<32x2xf32>
    %20 = math.exp %19 : vector<32x2xf32>
    %cst_18 = arith.constant 1.000000e+00 : f32
    %21 = vector.broadcast %cst_18 : f32 to vector<32x2xf32>
    %22 = arith.addf %21, %20 : vector<32x2xf32>
    %23 = arith.divf %21, %22 : vector<32x2xf32>
    %24 = vector.extract_strided_slice %10 {offsets = [32, 0], sizes = [32, 2], strides = [1, 1]} : vector<96x2xf32> to vector<32x2xf32>
    %25 = vector.extract_strided_slice %15 {offsets = [32, 0], sizes = [32, 2], strides = [1, 1]} : vector<96x2xf32> to vector<32x2xf32>
    %26 = arith.addf %24, %25 : vector<32x2xf32>
    %27 = arith.negf %26 : vector<32x2xf32>
    %28 = math.exp %27 : vector<32x2xf32>
    %cst_19 = arith.constant 1.000000e+00 : f32
    %29 = vector.broadcast %cst_19 : f32 to vector<32x2xf32>
    %30 = arith.addf %29, %28 : vector<32x2xf32>
    %31 = arith.divf %29, %30 : vector<32x2xf32>
    %32 = vector.extract_strided_slice %10 {offsets = [64, 0], sizes = [32, 2], strides = [1, 1]} : vector<96x2xf32> to vector<32x2xf32>
    %33 = vector.extract_strided_slice %15 {offsets = [64, 0], sizes = [32, 2], strides = [1, 1]} : vector<96x2xf32> to vector<32x2xf32>
    %34 = arith.mulf %23, %33 : vector<32x2xf32>
    %35 = arith.addf %32, %34 : vector<32x2xf32>
    %36 = math.tanh %35 : vector<32x2xf32>
    %cst_20 = arith.constant 1.000000e+00 : f32
    %37 = vector.broadcast %cst_20 : f32 to vector<32x2xf32>
    %38 = arith.subf %37, %31 : vector<32x2xf32>
    %39 = arith.mulf %38, %36 : vector<32x2xf32>
    %40 = arith.mulf %31, %3 : vector<32x2xf32>
    %41 = arith.addf %39, %40 : vector<32x2xf32>
    %c0_21 = arith.constant 0 : index
    %c0_22 = arith.constant 0 : index
    %42 = vector.load %arg17[%c0_21, %c0_22] : memref<32x2xf32, #tpu.memory_space<vmem>>, vector<32x2xf32>
    tpu.vector_store %arg17[%c0_21, %c0_22], %41 {strides = array<i32>} : memref<32x2xf32, #tpu.memory_space<vmem>>, vector<32x2xf32>,
    %c0_23 = arith.constant 0 : index
    %c0_24 = arith.constant 0 : index
    %43 = vector.load %arg9[%c0_23, %c0_24] : memref<32x32xf32, #tpu.memory_space<vmem>>, vector<32x32xf32>
    %cst_25 = arith.constant dense<0.000000e+00> : vector<32x2xf32>
    %44 = tpu.matmul %43, %41, %cst_25 {dimension_numbers = #tpu.dot_dimension_numbers<[1], [0], [0], [1], [0, 0, 1, 1], [], []>} : vector<32x32xf32>, vector<32x2xf32>, vector<32x2xf32> -> vector<32x2xf32>
    %c0_26 = arith.constant 0 : index
    %c0_27 = arith.constant 0 : index
    %45 = vector.load %arg8[%c0_26, %c0_27] : memref<32x64xf32, #tpu.memory_space<vmem>>, vector<32x64xf32>
    %cst_28 = arith.constant dense<0.000000e+00> : vector<32x16xf32>
    %46 = tpu.matmul %45, %0, %cst_28 {dimension_numbers = #tpu.dot_dimension_numbers<[1], [0], [0], [1], [0, 0, 1, 1], [], []>} : vector<32x64xf32>, vector<64x16xf32>, vector<32x16xf32> -> vector<32x16xf32>
    %cst_29 = arith.constant dense<0.000000e+00> : vector<32x16xf32>
    %47 = tpu.matmul %44, %4, %cst_29 {dimension_numbers = #tpu.dot_dimension_numbers<[1], [0], [0], [1], [0, 0, 1, 1], [], []>} : vector<32x2xf32>, vector<2x16xf32>, vector<32x16xf32> -> vector<32x16xf32>
    %48 = arith.addf %46, %47 : vector<32x16xf32>
    %49 = math.tanh %48 : vector<32x16xf32>
    %c0_30 = arith.constant 0 : index
    %c0_31 = arith.constant 0 : index
    %50 = vector.load %arg10[%c0_30, %c0_31] : memref<32x1xf32, #tpu.memory_space<vmem>>, vector<32x1xf32>
    %51 = vector.broadcast %50 : vector<32x1xf32> to vector<32x16xf32>
    %52 = arith.mulf %51, %49 : vector<32x16xf32>
    %cst_32 = arith.constant dense<0.000000e+00> : vector<16xf32>
    %53 = vector.multi_reduction <add>, %52, %cst_32 [0] : vector<32x16xf32> to vector<16xf32>
    %54 = vector.shape_cast %53 : vector<16xf32> to vector<1x16xf32>
    %cst_33 = arith.constant dense<0xFF800000> : vector<1xf32>
    %55 = vector.multi_reduction <maximumf>, %54, %cst_33 [1] : vector<1x16xf32> to vector<1xf32>
    %56 = vector.shape_cast %55 : vector<1xf32> to vector<1x1xf32>
    %57 = vector.broadcast %56 : vector<1x1xf32> to vector<1x16xf32>
    %58 = arith.subf %54, %57 : vector<1x16xf32>
    %59 = math.exp %58 : vector<1x16xf32>
    %cst_34 = arith.constant dense<0.000000e+00> : vector<1x2xf32>
    %60 = tpu.matmul %59, %5, %cst_34 {dimension_numbers = #tpu.dot_dimension_numbers<[1], [0], [0], [1], [0, 0, 1, 1], [], []>} : vector<1x16xf32>, vector<16x2xf32>, vector<1x2xf32> -> vector<1x2xf32>
    %61 = vector.broadcast %59 : vector<1x16xf32> to vector<32x16xf32>
    %62 = arith.mulf %1, %61 : vector<32x16xf32>
    %cst_35 = arith.constant dense<0.000000e+00> : vector<32x2xf32>
    %63 = tpu.matmul %62, %5, %cst_35 {dimension_numbers = #tpu.dot_dimension_numbers<[1], [0], [0], [1], [0, 0, 1, 1], [], []>} : vector<32x16xf32>, vector<16x2xf32>, vector<32x2xf32> -> vector<32x2xf32>
    %cst_36 = arith.constant 1.000000e+00 : f32
    %64 = vector.broadcast %cst_36 : f32 to vector<1x2xf32>
    %65 = arith.divf %64, %60 : vector<1x2xf32>
    %66 = vector.broadcast %65 : vector<1x2xf32> to vector<32x2xf32>
    %67 = arith.mulf %63, %66 : vector<32x2xf32>
    %c0_37 = arith.constant 0 : index
    %c0_38 = arith.constant 0 : index
    %68 = vector.load %arg12[%c0_37, %c0_38] : memref<32x32xf32, #tpu.memory_space<vmem>>, vector<32x32xf32>
    %cst_39 = arith.constant dense<0.000000e+00> : vector<32x2xf32>
    %69 = tpu.matmul %68, %67, %cst_39 {dimension_numbers = #tpu.dot_dimension_numbers<[1], [0], [0], [1], [0, 0, 1, 1], [], []>} : vector<32x32xf32>, vector<32x2xf32>, vector<32x2xf32> -> vector<32x2xf32>
    %c0_40 = arith.constant 0 : index
    %c0_41 = arith.constant 0 : index
    %70 = vector.load %arg11[%c0_40, %c0_41] : memref<32x32xf32, #tpu.memory_space<vmem>>, vector<32x32xf32>
    %cst_42 = arith.constant dense<0.000000e+00> : vector<32x16xf32>
    %71 = tpu.matmul %70, %1, %cst_42 {dimension_numbers = #tpu.dot_dimension_numbers<[1], [0], [0], [1], [0, 0, 1, 1], [], []>} : vector<32x32xf32>, vector<32x16xf32>, vector<32x16xf32> -> vector<32x16xf32>
    %cst_43 = arith.constant dense<0.000000e+00> : vector<32x16xf32>
    %72 = tpu.matmul %69, %4, %cst_43 {dimension_numbers = #tpu.dot_dimension_numbers<[1], [0], [0], [1], [0, 0, 1, 1], [], []>} : vector<32x2xf32>, vector<2x16xf32>, vector<32x16xf32> -> vector<32x16xf32>
    %73 = arith.addf %71, %72 : vector<32x16xf32>
    %74 = math.tanh %73 : vector<32x16xf32>
    %c0_44 = arith.constant 0 : index
    %c0_45 = arith.constant 0 : index
    %75 = vector.load %arg13[%c0_44, %c0_45] : memref<32x1xf32, #tpu.memory_space<vmem>>, vector<32x1xf32>
    %76 = vector.broadcast %75 : vector<32x1xf32> to vector<32x16xf32>
    %77 = arith.mulf %76, %74 : vector<32x16xf32>
    %cst_46 = arith.constant dense<0.000000e+00> : vector<16xf32>
    %78 = vector.multi_reduction <add>, %77, %cst_46 [0] : vector<32x16xf32> to vector<16xf32>
    %79 = vector.shape_cast %78 : vector<16xf32> to vector<1x16xf32>
    %c0_47 = arith.constant 0 : index
    %c0_48 = arith.constant 0 : index
    %80 = vector.load %arg16[%c0_47, %c0_48] : memref<1x16xf32, #tpu.memory_space<vmem>>, vector<1x16xf32>
    tpu.vector_store %arg16[%c0_47, %c0_48], %79 {strides = array<i32>} : memref<1x16xf32, #tpu.memory_space<vmem>>, vector<1x16xf32>,
    return
  }
  func.func @transform_0(%arg0: i32) -> (i32, i32) {
    %c0_i32 = arith.constant 0 : i32
    %c0_i32_0 = arith.constant 0 : i32
    return %c0_i32, %arg0 : i32, i32
  }
  func.func @transform_1(%arg0: i32) -> (i32, i32) {
    %c0_i32 = arith.constant 0 : i32
    %c0_i32_0 = arith.constant 0 : i32
    return %c0_i32, %arg0 : i32, i32
  }
  func.func @transform_2(%arg0: i32) -> (i32, i32) {
    %c0_i32 = arith.constant 0 : i32
    %c0_i32_0 = arith.constant 0 : i32
    return %c0_i32, %arg0 : i32, i32
  }
  func.func @transform_3(%arg0: i32) -> (i32, i32) {
    %c0_i32 = arith.constant 0 : i32
    %c0_i32_0 = arith.constant 0 : i32
    %c0_i32_1 = arith.constant 0 : i32
    return %c0_i32, %c0_i32_0 : i32, i32
  }
  func.func @transform_4(%arg0: i32) -> (i32, i32) {
    %c0_i32 = arith.constant 0 : i32
    %c0_i32_0 = arith.constant 0 : i32
    %c0_i32_1 = arith.constant 0 : i32
    return %c0_i32, %c0_i32_0 : i32, i32
  }
  func.func @transform_5(%arg0: i32) -> (i32, i32) {
    %c0_i32 = arith.constant 0 : i32
    %c0_i32_0 = arith.constant 0 : i32
    %c0_i32_1 = arith.constant 0 : i32
    return %c0_i32, %c0_i32_0 : i32, i32
  }
  func.func @transform_6(%arg0: i32) -> (i32, i32) {
    %c0_i32 = arith.constant 0 : i32
    %c0_i32_0 = arith.constant 0 : i32
    %c0_i32_1 = arith.constant 0 : i32
    return %c0_i32, %c0_i32_0 : i32, i32
  }
  func.func @transform_7(%arg0: i32) -> (i32, i32) {
    %c0_i32 = arith.constant 0 : i32
    %c0_i32_0 = arith.constant 0 : i32
    %c0_i32_1 = arith.constant 0 : i32
    return %c0_i32, %c0_i32_0 : i32, i32
  }
  func.func @transform_8(%arg0: i32) -> (i32, i32) {
    %c0_i32 = arith.constant 0 : i32
    %c0_i32_0 = arith.constant 0 : i32
    %c0_i32_1 = arith.constant 0 : i32
    return %c0_i32, %c0_i32_0 : i32, i32
  }
  func.func @transform_9(%arg0: i32) -> (i32, i32) {
    %c0_i32 = arith.constant 0 : i32
    %c0_i32_0 = arith.constant 0 : i32
    %c0_i32_1 = arith.constant 0 : i32
    return %c0_i32, %c0_i32_0 : i32, i32
  }
  func.func @transform_10(%arg0: i32) -> (i32, i32) {
    %c0_i32 = arith.constant 0 : i32
    %c0_i32_0 = arith.constant 0 : i32
    %c0_i32_1 = arith.constant 0 : i32
    return %c0_i32, %c0_i32_0 : i32, i32
  }
  func.func @transform_11(%arg0: i32) -> (i32, i32) {
    %c0_i32 = arith.constant 0 : i32
    %c0_i32_0 = arith.constant 0 : i32
    %c0_i32_1 = arith.constant 0 : i32
    return %c0_i32, %c0_i32_0 : i32, i32
  }
  func.func @transform_12(%arg0: i32) -> (i32, i32) {
    %c0_i32 = arith.constant 0 : i32
    %c0_i32_0 = arith.constant 0 : i32
    %c0_i32_1 = arith.constant 0 : i32
    return %c0_i32, %c0_i32_0 : i32, i32
  }
  func.func @transform_13(%arg0: i32) -> (i32, i32) {
    %c0_i32 = arith.constant 0 : i32
    %c0_i32_0 = arith.constant 0 : i32
    %c0_i32_1 = arith.constant 0 : i32
    return %c0_i32, %c0_i32_0 : i32, i32
  }
  func.func @transform_14(%arg0: i32) -> (i32, i32) {
    %c0_i32 = arith.constant 0 : i32
    %c0_i32_0 = arith.constant 0 : i32
    %c0_i32_1 = arith.constant 0 : i32
    return %c0_i32, %c0_i32_0 : i32, i32
  }
  func.func @transform_15(%arg0: i32) -> (i32, i32) {
    %c0_i32 = arith.constant 0 : i32
    %c0_i32_0 = arith.constant 0 : i32
    return %c0_i32, %arg0 : i32, i32
  }
  func.func @transform_16(%arg0: i32) -> (i32, i32) {
    %c0_i32 = arith.constant 0 : i32
    %c0_i32_0 = arith.constant 0 : i32
    return %c0_i32, %arg0 : i32, i32
  }
}

</mosaic_0001>

<llo_original>
// kernel: pointer_forward.1
$region0: #{pointer_forward.1}
  #allocation0 [shape = 'u32[]', space=smem, size = 0x4, offset = 0x4, fixed_abs, tag = 'smem constant byte address 0x4 - core index']
  #allocation1 [shape = 'u32[144,128]{1,0:T(1,128)}', space=vmem, size = 0x12000, scoped, tag = 'internal scratch']
  %s0 = inlined_call_operand.vmem [shape: f32[64,16], index: 0, kind: input, shape index: {}]
  %s1 = inlined_call_operand.vmem [shape: f32[32,2], index: 1, kind: input, shape index: {}]
  %s2 = inlined_call_operand.vmem [shape: f32[32,2], index: 2, kind: input, shape index: {}]
  %s3 = inlined_call_operand.vmem [shape: f32[96,32], index: 3, kind: input, shape index: {}]
  %s4 = inlined_call_operand.vmem [shape: f32[96,32], index: 4, kind: input, shape index: {}]
  %s5 = inlined_call_operand.vmem [shape: f32[96,1], index: 5, kind: input, shape index: {}]
  %s6 = inlined_call_operand.vmem [shape: f32[96,1], index: 6, kind: input, shape index: {}]
  %s7 = inlined_call_operand.vmem [shape: f32[32,64], index: 7, kind: input, shape index: {}]
  %s8 = inlined_call_operand.vmem [shape: f32[32,32], index: 8, kind: input, shape index: {}]
  %s9 = inlined_call_operand.vmem [shape: f32[32,1], index: 9, kind: input, shape index: {}]
  %s10 = inlined_call_operand.vmem [shape: f32[32,32], index: 10, kind: input, shape index: {}]
  %s11 = inlined_call_operand.vmem [shape: f32[32,32], index: 11, kind: input, shape index: {}]
  %s12 = inlined_call_operand.vmem [shape: f32[32,1], index: 12, kind: input, shape index: {}]
  %s13 = inlined_call_operand.vmem [shape: f32[2,16], index: 13, kind: input, shape index: {}]
  %s14 = inlined_call_operand.vmem [shape: f32[16,2], index: 14, kind: input, shape index: {}]
  %s15 = inlined_call_operand.vmem [shape: f32[1,16], index: 15, kind: output, shape index: {0}]
  %s16 = inlined_call_operand.vmem [shape: f32[32,2], index: 16, kind: output, shape index: {1}]
  %17 = xla_tuple %s15, %s16
  %s18 = sld [smem:[#allocation0]]
  $region78: #{pointer_forward.1} parent=0
    _
  %s20 = ssub.s32 1, %s18
  %s21 = scalar_select 0, %s20, %s18
  // Predicated region
  $region2: #{pointer_forward.1} parent=0 // pred_check
    _
  $region3: #{pointer_forward.1} parent=0 // pred_check_branch
    %23 = sbr.rel (0) target = $region5
  $region4: #{pointer_forward.1} parent=0 // pred_region
    _
  $region5: #{pointer_forward.1} parent=0 // pred_fallthru
    _
  // Predicated region
  $region6: #{pointer_forward.1} parent=0 // pred_check
    _
  $region7: #{pointer_forward.1} parent=0 // pred_check_branch
    %25 = sbr.rel (0) target = $region9
  $region8: #{pointer_forward.1} parent=0 // pred_region
    _
  $region9: #{pointer_forward.1} parent=0 // pred_fallthru
    _
  // Predicated region
  $region10: #{pointer_forward.1} parent=0 // pred_check
    _
  $region11: #{pointer_forward.1} parent=0 // pred_check_branch
    %27 = sbr.rel (0) target = $region13
  $region12: #{pointer_forward.1} parent=0 // pred_region
    _
  $region13: #{pointer_forward.1} parent=0 // pred_fallthru
    _
  // Predicated region
  $region14: #{pointer_forward.1} parent=0 // pred_check
    _
  $region15: #{pointer_forward.1} parent=0 // pred_check_branch
    %29 = sbr.rel (0) target = $region17
  $region16: #{pointer_forward.1} parent=0 // pred_region
    _
  $region17: #{pointer_forward.1} parent=0 // pred_fallthru
    _
  // Predicated region
  $region18: #{pointer_forward.1} parent=0 // pred_check
    _
  $region19: #{pointer_forward.1} parent=0 // pred_check_branch
    %31 = sbr.rel (0) target = $region21
  $region20: #{pointer_forward.1} parent=0 // pred_region
    _
  $region21: #{pointer_forward.1} parent=0 // pred_fallthru
    _
  // Predicated region
  $region22: #{pointer_forward.1} parent=0 // pred_check
    _
  $region23: #{pointer_forward.1} parent=0 // pred_check_branch
    %33 = sbr.rel (0) target = $region25
  $region24: #{pointer_forward.1} parent=0 // pred_region
    _
  $region25: #{pointer_forward.1} parent=0 // pred_fallthru
    _
  // Predicated region
  $region26: #{pointer_forward.1} parent=0 // pred_check
    _
  $region27: #{pointer_forward.1} parent=0 // pred_check_branch
    %35 = sbr.rel (0) target = $region29
  $region28: #{pointer_forward.1} parent=0 // pred_region
    _
  $region29: #{pointer_forward.1} parent=0 // pred_fallthru
    _
  // Predicated region
  $region30: #{pointer_forward.1} parent=0 // pred_check
    _
  $region31: #{pointer_forward.1} parent=0 // pred_check_branch
    %37 = sbr.rel (0) target = $region33
  $region32: #{pointer_forward.1} parent=0 // pred_region
    _
  $region33: #{pointer_forward.1} parent=0 // pred_fallthru
    _
  // Predicated region
  $region34: #{pointer_forward.1} parent=0 // pred_check
    _
  $region35: #{pointer_forward.1} parent=0 // pred_check_branch
    %39 = sbr.rel (0) target = $region37
  $region36: #{pointer_forward.1} parent=0 // pred_region
    _
  $region37: #{pointer_forward.1} parent=0 // pred_fallthru
    _
  // Predicated region
  $region38: #{pointer_forward.1} parent=0 // pred_check
    _
  $region39: #{pointer_forward.1} parent=0 // pred_check_branch
    %41 = sbr.rel (0) target = $region41
  $region40: #{pointer_forward.1} parent=0 // pred_region
    _
  $region41: #{pointer_forward.1} parent=0 // pred_fallthru
    _
  // Predicated region
  $region42: #{pointer_forward.1} parent=0 // pred_check
    _
  $region43: #{pointer_forward.1} parent=0 // pred_check_branch
    %43 = sbr.rel (0) target = $region45
  $region44: #{pointer_forward.1} parent=0 // pred_region
    _
  $region45: #{pointer_forward.1} parent=0 // pred_fallthru
    _
  // Predicated region
  $region46: #{pointer_forward.1} parent=0 // pred_check
    _
  $region47: #{pointer_forward.1} parent=0 // pred_check_branch
    %45 = sbr.rel (0) target = $region49
  $region48: #{pointer_forward.1} parent=0 // pred_region
    _
  $region49: #{pointer_forward.1} parent=0 // pred_fallthru
    _
  // Predicated region
  $region50: #{pointer_forward.1} parent=0 // pred_check
    _
  $region51: #{pointer_forward.1} parent=0 // pred_check_branch
    %47 = sbr.rel (0) target = $region53
  $region52: #{pointer_forward.1} parent=0 // pred_region
    _
  $region53: #{pointer_forward.1} parent=0 // pred_fallthru
    _
  // Predicated region
  $region54: #{pointer_forward.1} parent=0 // pred_check
    _
  $region55: #{pointer_forward.1} parent=0 // pred_check_branch
    %49 = sbr.rel (0) target = $region57
  $region56: #{pointer_forward.1} parent=0 // pred_region
    _
  $region57: #{pointer_forward.1} parent=0 // pred_fallthru
    _
  // Predicated region
  $region58: #{pointer_forward.1} parent=0 // pred_check
    _
  $region59: #{pointer_forward.1} parent=0 // pred_check_branch
    %51 = sbr.rel (0) target = $region61
  $region60: #{pointer_forward.1} parent=0 // pred_region
    _
  $region61: #{pointer_forward.1} parent=0 // pred_fallthru
    _
  %v52 = vld [vmem:[%s0] sm:$0xff]
  %v53 = vld [vmem:[%s0 + $0x8] sm:$0xff]
  %v54 = vld [vmem:[%s0 + $0x10] sm:$0xff]
  %v55 = vld [vmem:[%s0 + $0x18] sm:$0xff]
  %v56 = vld [vmem:[%s0 + $0x20] sm:$0xff]
  %v57 = vld [vmem:[%s0 + $0x28] sm:$0xff]
  %v58 = vld [vmem:[%s0 + $0x30] sm:$0xff]
  %v59 = vld [vmem:[%s0 + $0x38] sm:$0xff]
  %v60 = vld [vmem:[%s1] sm:$0xff]
  %v61 = vld [vmem:[%s1 + $0x8] sm:$0xff]
  %v62 = vld [vmem:[%s1 + $0x10] sm:$0xff]
  %v63 = vld [vmem:[%s1 + $0x18] sm:$0xff]
  %v64 = vld [vmem:[%s2] sm:$0xff]
  %v65 = vld [vmem:[%s2 + $0x8] sm:$0xff]
  %v66 = vld [vmem:[%s2 + $0x10] sm:$0xff]
  %v67 = vld [vmem:[%s2 + $0x18] sm:$0xff]
  %v68 = vld [vmem:[%s13] sm:$0x3]
  %v69 = vld [vmem:[%s14] sm:$0xff]
  %v70 = vld [vmem:[%s14 + $0x8] sm:$0xff]
  %v71 = vld [vmem:[%s3] sm:$0xff]
  %v72 = vld [vmem:[%s3 + $0x8] sm:$0xff]
  %v73 = vld [vmem:[%s3 + $0x10] sm:$0xff]
  %v74 = vld [vmem:[%s3 + $0x18] sm:$0xff]
  %v75 = vld [vmem:[%s3 + $0x20] sm:$0xff]
  %v76 = vld [vmem:[%s3 + $0x28] sm:$0xff]
  %v77 = vld [vmem:[%s3 + $0x30] sm:$0xff]
  %v78 = vld [vmem:[%s3 + $0x38] sm:$0xff]
  %v79 = vld [vmem:[%s3 + $0x40] sm:$0xff]
  %v80 = vld [vmem:[%s3 + $0x48] sm:$0xff]
  %v81 = vld [vmem:[%s3 + $0x50] sm:$0xff]
  %v82 = vld [vmem:[%s3 + $0x58] sm:$0xff]
  %v83 = vld [vmem:[%s5] sm:$0xff]
  %v84 = vld [vmem:[%s5 + $0x8] sm:$0xff]
  %v85 = vld [vmem:[%s5 + $0x10] sm:$0xff]
  %v86 = vld [vmem:[%s5 + $0x18] sm:$0xff]
  %v87 = vld [vmem:[%s5 + $0x20] sm:$0xff]
  %v88 = vld [vmem:[%s5 + $0x28] sm:$0xff]
  %v89 = vld [vmem:[%s5 + $0x30] sm:$0xff]
  %v90 = vld [vmem:[%s5 + $0x38] sm:$0xff]
  %v91 = vld [vmem:[%s5 + $0x40] sm:$0xff]
  %v92 = vld [vmem:[%s5 + $0x48] sm:$0xff]
  %v93 = vld [vmem:[%s5 + $0x50] sm:$0xff]
  %v94 = vld [vmem:[%s5 + $0x58] sm:$0xff]
  %96 = vset.pattern.permute.xlu0 0
  %97 = vperm.xlu0 %96, %v83
  %v98 = vpop.permute.xlu0 %97
  %101 = vset.pattern.permute.xlu0 0
  %102 = vperm.xlu0 %101, %v84
  %v103 = vpop.permute.xlu0 %102
  %106 = vset.pattern.permute.xlu0 0
  %107 = vperm.xlu0 %106, %v85
  %v108 = vpop.permute.xlu0 %107
  %111 = vset.pattern.permute.xlu0 0
  %112 = vperm.xlu0 %111, %v86
  %v113 = vpop.permute.xlu0 %112
  %116 = vset.pattern.permute.xlu0 0
  %117 = vperm.xlu0 %116, %v87
  %v118 = vpop.permute.xlu0 %117
  %121 = vset.pattern.permute.xlu0 0
  %122 = vperm.xlu0 %121, %v88
  %v123 = vpop.permute.xlu0 %122
  %126 = vset.pattern.permute.xlu0 0
  %127 = vperm.xlu0 %126, %v89
  %v128 = vpop.permute.xlu0 %127
  %131 = vset.pattern.permute.xlu0 0
  %132 = vperm.xlu0 %131, %v90
  %v133 = vpop.permute.xlu0 %132
  %136 = vset.pattern.permute.xlu0 0
  %137 = vperm.xlu0 %136, %v91
  %v138 = vpop.permute.xlu0 %137
  %141 = vset.pattern.permute.xlu0 0
  %142 = vperm.xlu0 %141, %v92
  %v143 = vpop.permute.xlu0 %142
  %146 = vset.pattern.permute.xlu0 0
  %147 = vperm.xlu0 %146, %v93
  %v148 = vpop.permute.xlu0 %147
  %151 = vset.pattern.permute.xlu0 0
  %152 = vperm.xlu0 %151, %v94
  %v153 = vpop.permute.xlu0 %152
  %vm155 = vcmask 261120
  %v157 = vsel %vm155, %v71, 0
  %v160 = vsel %vm155, %v72, 0
  %v163 = vsel %vm155, %v73, 0
  %v166 = vsel %vm155, %v74, 0
  %v169 = vsel %vm155, %v75, 0
  %v172 = vsel %vm155, %v76, 0
  %v175 = vsel %vm155, %v77, 0
  %v178 = vsel %vm155, %v78, 0
  %v181 = vsel %vm155, %v79, 0
  %v184 = vsel %vm155, %v80, 0
  %v187 = vsel %vm155, %v81, 0
  %v190 = vsel %vm155, %v82, 0
  %192 = vmatprep.subr.mxu0 0.0
  %193 = vmatpush1.msra.mxu0 0.0
  %194 = vmatprep.subr.mxu0 0.0
  %195 = vmatpush1.msra.mxu0 0.0
  %196 = vmatprep.subr.mxu0 0.0
  %197 = vmatpush1.msra.mxu0 0.0
  %198 = vmatprep.subr.mxu0 0.0
  %199 = vmatpush1.msra.mxu0 0.0
  %200 = vmatprep.subr.mxu0 0.0
  %201 = vmatpush1.msra.mxu0 0.0
  %202 = vmatprep.subr.mxu0 0.0
  %203 = vmatpush1.msra.mxu0 0.0
  %204 = vmatprep.subr.mxu0 0.0
  %205 = vmatpush1.msra.mxu0 0.0
  %206 = vmatprep.subr.mxu0 0.0
  %207 = vmatpush1.msra.mxu0 0.0
  %208 = vmatprep.subr.mxu0 0.0
  %209 = vmatpush1.msra.mxu0 0.0
  %210 = vmatprep.subr.mxu0 0.0
  %211 = vmatpush1.msra.mxu0 0.0
  %212 = vmatprep.subr.mxu0 0.0
  %213 = vmatpush1.msra.mxu0 0.0
  %214 = vmatprep.subr.mxu0 0.0
  %215 = vmatpush1.msra.mxu0 0.0
  %216 = vmatprep.subr.mxu0 0.0
  %217 = vmatpush1.msra.mxu0 %v63
  %218 = vmatprep.subr.mxu0 0.0
  %219 = vmatpush1.msra.mxu0 %v62
  %220 = vmatprep.subr.mxu0 0.0
  %221 = vmatpush1.msra.mxu0 %v61
  %222 = vmatprep.subr.mxu0 0.0
  %223 = vmatpush1.msra.mxu0 %v60
  %224 = vmatprep.subr.mxu0 0.0
  %225 = vmatpush2.msra.mxu0 0.0
  %226 = vmatprep.subr.mxu0 0.0
  %227 = vmatpush2.msra.mxu0 0.0
  %228 = vmatprep.subr.mxu0 0.0
  %229 = vmatpush2.msra.mxu0 0.0
  %230 = vmatprep.subr.mxu0 0.0
  %231 = vmatpush2.msra.mxu0 0.0
  %232 = vmatprep.subr.mxu0 0.0
  %233 = vmatpush2.msra.mxu0 0.0
  %234 = vmatprep.subr.mxu0 0.0
  %235 = vmatpush2.msra.mxu0 0.0
  %236 = vmatprep.subr.mxu0 0.0
  %237 = vmatpush2.msra.mxu0 0.0
  %238 = vmatprep.subr.mxu0 0.0
  %239 = vmatpush2.msra.mxu0 0.0
  %240 = vmatprep.subr.mxu0 0.0
  %241 = vmatpush2.msra.mxu0 0.0
  %242 = vmatprep.subr.mxu0 0.0
  %243 = vmatpush2.msra.mxu0 0.0
  %244 = vmatprep.subr.mxu0 0.0
  %245 = vmatpush2.msra.mxu0 0.0
  %246 = vmatprep.subr.mxu0 0.0
  %247 = vmatpush2.msra.mxu0 0.0
  %248 = vmatprep.subr.mxu0 0.0
  %249 = vmatpush2.msra.mxu0 0.0
  %250 = vmatprep.subr.mxu0 0.0
  %251 = vmatpush2.msra.mxu0 0.0
  %252 = vmatprep.subr.mxu0 0.0
  %253 = vmatpush2.msra.mxu0 0.0
  %254 = vmatprep.subr.mxu0 0.0
  %255 = vmatpush2.msra.mxu0 0.0
  %256 = vmatprep.mubr.f32.mxu0 0.0
  %257 = vmatmul.mubr.f32.gmra.mxu0 %v157
  %v258 = vpop.f32.mrf.mxu0
  %v259 = vadd.f32 %v98, %v258
  %v260 = vpop.f32.mrf.mxu0
  %261 = vmatprep.mubr.f32.mxu0 0.0
  %262 = vmatmul.mubr.f32.gmra.mxu0 %v160
  %v263 = vpop.f32.mrf.mxu0
  %v264 = vadd.f32 %v103, %v263
  %v265 = vpop.f32.mrf.mxu0
  %266 = vmatprep.mubr.f32.mxu0 0.0
  %267 = vmatmul.mubr.f32.gmra.mxu0 %v163
  %v268 = vpop.f32.mrf.mxu0
  %v269 = vadd.f32 %v108, %v268
  %v270 = vpop.f32.mrf.mxu0
  %271 = vmatprep.mubr.f32.mxu0 0.0
  %272 = vmatmul.mubr.f32.gmra.mxu0 %v166
  %v273 = vpop.f32.mrf.mxu0
  %v274 = vadd.f32 %v113, %v273
  %v275 = vpop.f32.mrf.mxu0
  %276 = vmatprep.mubr.f32.mxu0 0.0
  %277 = vmatmul.mubr.f32.gmra.mxu0 %v169
  %v278 = vpop.f32.mrf.mxu0
  %v279 = vadd.f32 %v118, %v278
  %v280 = vpop.f32.mrf.mxu0
  %281 = vmatprep.mubr.f32.mxu0 0.0
  %282 = vmatmul.mubr.f32.gmra.mxu0 %v172
  %v283 = vpop.f32.mrf.mxu0
  %v284 = vadd.f32 %v123, %v283
  %v285 = vpop.f32.mrf.mxu0
  %286 = vmatprep.mubr.f32.mxu0 0.0
  %287 = vmatmul.mubr.f32.gmra.mxu0 %v175
  %v288 = vpop.f32.mrf.mxu0
  %v289 = vadd.f32 %v128, %v288
  %v290 = vpop.f32.mrf.mxu0
  %291 = vmatprep.mubr.f32.mxu0 0.0
  %292 = vmatmul.mubr.f32.gmra.mxu0 %v178
  %v293 = vpop.f32.mrf.mxu0
  %v294 = vadd.f32 %v133, %v293
  %v295 = vpop.f32.mrf.mxu0
  %296 = vmatprep.mubr.f32.mxu0 0.0
  %297 = vmatmul.mubr.f32.gmra.mxu0 %v181
  %v298 = vpop.f32.mrf.mxu0
  %v299 = vadd.f32 %v138, %v298
  %v300 = vpop.f32.mrf.mxu0
  %301 = vmatprep.mubr.f32.mxu0 0.0
  %302 = vmatmul.mubr.f32.gmra.mxu0 %v184
  %v303 = vpop.f32.mrf.mxu0
  %v304 = vadd.f32 %v143, %v303
  %v305 = vpop.f32.mrf.mxu0
  %306 = vmatprep.mubr.f32.mxu0 0.0
  %307 = vmatmul.mubr.f32.gmra.mxu0 %v187
  %v308 = vpop.f32.mrf.mxu0
  %v309 = vadd.f32 %v148, %v308
  %v310 = vpop.f32.mrf.mxu0
  %311 = vmatprep.mubr.f32.mxu0 0.0
  %312 = vmatmul.mubr.f32.gmra.mxu0 %v190
  %v313 = vpop.f32.mrf.mxu0
  %v314 = vadd.f32 %v153, %v313
  %v315 = vpop.f32.mrf.mxu0
  %316 = vdwg.mxu0
  %v317 = vld [vmem:[%s4] sm:$0xff]
  %v318 = vld [vmem:[%s4 + $0x8] sm:$0xff]
  %v319 = vld [vmem:[%s4 + $0x10] sm:$0xff]
  %v320 = vld [vmem:[%s4 + $0x18] sm:$0xff]
  %v321 = vld [vmem:[%s4 + $0x20] sm:$0xff]
  %v322 = vld [vmem:[%s4 + $0x28] sm:$0xff]
  %v323 = vld [vmem:[%s4 + $0x30] sm:$0xff]
  %v324 = vld [vmem:[%s4 + $0x38] sm:$0xff]
  %v325 = vld [vmem:[%s4 + $0x40] sm:$0xff]
  %v326 = vld [vmem:[%s4 + $0x48] sm:$0xff]
  %v327 = vld [vmem:[%s4 + $0x50] sm:$0xff]
  %v328 = vld [vmem:[%s4 + $0x58] sm:$0xff]
  %v329 = vld [vmem:[%s6] sm:$0xff]
  %v330 = vld [vmem:[%s6 + $0x8] sm:$0xff]
  %v331 = vld [vmem:[%s6 + $0x10] sm:$0xff]
  %v332 = vld [vmem:[%s6 + $0x18] sm:$0xff]
  %v333 = vld [vmem:[%s6 + $0x20] sm:$0xff]
  %v334 = vld [vmem:[%s6 + $0x28] sm:$0xff]
  %v335 = vld [vmem:[%s6 + $0x30] sm:$0xff]
  %v336 = vld [vmem:[%s6 + $0x38] sm:$0xff]
  %v337 = vld [vmem:[%s6 + $0x40] sm:$0xff]
  %v338 = vld [vmem:[%s6 + $0x48] sm:$0xff]
  %v339 = vld [vmem:[%s6 + $0x50] sm:$0xff]
  %v340 = vld [vmem:[%s6 + $0x58] sm:$0xff]
  %342 = vset.pattern.permute.xlu0 0
  %343 = vperm.xlu0 %342, %v329
  %v344 = vpop.permute.xlu0 %343
  %347 = vset.pattern.permute.xlu0 0
  %348 = vperm.xlu0 %347, %v330
  %v349 = vpop.permute.xlu0 %348
  %352 = vset.pattern.permute.xlu0 0
  %353 = vperm.xlu0 %352, %v331
  %v354 = vpop.permute.xlu0 %353
  %357 = vset.pattern.permute.xlu0 0
  %358 = vperm.xlu0 %357, %v332
  %v359 = vpop.permute.xlu0 %358
  %362 = vset.pattern.permute.xlu0 0
  %363 = vperm.xlu0 %362, %v333
  %v364 = vpop.permute.xlu0 %363
  %367 = vset.pattern.permute.xlu0 0
  %368 = vperm.xlu0 %367, %v334
  %v369 = vpop.permute.xlu0 %368
  %372 = vset.pattern.permute.xlu0 0
  %373 = vperm.xlu0 %372, %v335
  %v374 = vpop.permute.xlu0 %373
  %377 = vset.pattern.permute.xlu0 0
  %378 = vperm.xlu0 %377, %v336
  %v379 = vpop.permute.xlu0 %378
  %382 = vset.pattern.permute.xlu0 0
  %383 = vperm.xlu0 %382, %v337
  %v384 = vpop.permute.xlu0 %383
  %387 = vset.pattern.permute.xlu0 0
  %388 = vperm.xlu0 %387, %v338
  %v389 = vpop.permute.xlu0 %388
  %392 = vset.pattern.permute.xlu0 0
  %393 = vperm.xlu0 %392, %v339
  %v394 = vpop.permute.xlu0 %393
  %397 = vset.pattern.permute.xlu0 0
  %398 = vperm.xlu0 %397, %v340
  %v399 = vpop.permute.xlu0 %398
  %v402 = vsel %vm155, %v317, 0
  %v405 = vsel %vm155, %v318, 0
  %v408 = vsel %vm155, %v319, 0
  %v411 = vsel %vm155, %v320, 0
  %v414 = vsel %vm155, %v321, 0
  %v417 = vsel %vm155, %v322, 0
  %v420 = vsel %vm155, %v323, 0
  %v423 = vsel %vm155, %v324, 0
  %v426 = vsel %vm155, %v325, 0
  %v429 = vsel %vm155, %v326, 0
  %v432 = vsel %vm155, %v327, 0
  %v435 = vsel %vm155, %v328, 0
  %437 = vmatprep.subr.mxu0 0.0
  %438 = vmatpush1.msra.mxu0 0.0
  %439 = vmatprep.subr.mxu0 0.0
  %440 = vmatpush1.msra.mxu0 0.0
  %441 = vmatprep.subr.mxu0 0.0
  %442 = vmatpush1.msra.mxu0 0.0
  %443 = vmatprep.subr.mxu0 0.0
  %444 = vmatpush1.msra.mxu0 0.0
  %445 = vmatprep.subr.mxu0 0.0
  %446 = vmatpush1.msra.mxu0 0.0
  %447 = vmatprep.subr.mxu0 0.0
  %448 = vmatpush1.msra.mxu0 0.0
  %449 = vmatprep.subr.mxu0 0.0
  %450 = vmatpush1.msra.mxu0 0.0
  %451 = vmatprep.subr.mxu0 0.0
  %452 = vmatpush1.msra.mxu0 0.0
  %453 = vmatprep.subr.mxu0 0.0
  %454 = vmatpush1.msra.mxu0 0.0
  %455 = vmatprep.subr.mxu0 0.0
  %456 = vmatpush1.msra.mxu0 0.0
  %457 = vmatprep.subr.mxu0 0.0
  %458 = vmatpush1.msra.mxu0 0.0
  %459 = vmatprep.subr.mxu0 0.0
  %460 = vmatpush1.msra.mxu0 0.0
  %461 = vmatprep.subr.mxu0 0.0
  %462 = vmatpush1.msra.mxu0 %v67
  %463 = vmatprep.subr.mxu0 0.0
  %464 = vmatpush1.msra.mxu0 %v66
  %465 = vmatprep.subr.mxu0 0.0
  %466 = vmatpush1.msra.mxu0 %v65
  %467 = vmatprep.subr.mxu0 0.0
  %468 = vmatpush1.msra.mxu0 %v64
  %469 = vmatprep.subr.mxu0 0.0
  %470 = vmatpush2.msra.mxu0 0.0
  %471 = vmatprep.subr.mxu0 0.0
  %472 = vmatpush2.msra.mxu0 0.0
  %473 = vmatprep.subr.mxu0 0.0
  %474 = vmatpush2.msra.mxu0 0.0
  %475 = vmatprep.subr.mxu0 0.0
  %476 = vmatpush2.msra.mxu0 0.0
  %477 = vmatprep.subr.mxu0 0.0
  %478 = vmatpush2.msra.mxu0 0.0
  %479 = vmatprep.subr.mxu0 0.0
  %480 = vmatpush2.msra.mxu0 0.0
  %481 = vmatprep.subr.mxu0 0.0
  %482 = vmatpush2.msra.mxu0 0.0
  %483 = vmatprep.subr.mxu0 0.0
  %484 = vmatpush2.msra.mxu0 0.0
  %485 = vmatprep.subr.mxu0 0.0
  %486 = vmatpush2.msra.mxu0 0.0
  %487 = vmatprep.subr.mxu0 0.0
  %488 = vmatpush2.msra.mxu0 0.0
  %489 = vmatprep.subr.mxu0 0.0
  %490 = vmatpush2.msra.mxu0 0.0
  %491 = vmatprep.subr.mxu0 0.0
  %492 = vmatpush2.msra.mxu0 0.0
  %493 = vmatprep.subr.mxu0 0.0
  %494 = vmatpush2.msra.mxu0 0.0
  %495 = vmatprep.subr.mxu0 0.0
  %496 = vmatpush2.msra.mxu0 0.0
  %497 = vmatprep.subr.mxu0 0.0
  %498 = vmatpush2.msra.mxu0 0.0
  %499 = vmatprep.subr.mxu0 0.0
  %500 = vmatpush2.msra.mxu0 0.0
  %501 = vmatprep.mubr.f32.mxu0 0.0
  %502 = vmatmul.mubr.f32.gmra.mxu0 %v402
  %v503 = vpop.f32.mrf.mxu0
  %v504 = vadd.f32 %v344, %v503
  %v505 = vpop.f32.mrf.mxu0
  %506 = vmatprep.mubr.f32.mxu0 0.0
  %507 = vmatmul.mubr.f32.gmra.mxu0 %v405
  %v508 = vpop.f32.mrf.mxu0
  %v509 = vadd.f32 %v349, %v508
  %v510 = vpop.f32.mrf.mxu0
  %511 = vmatprep.mubr.f32.mxu0 0.0
  %512 = vmatmul.mubr.f32.gmra.mxu0 %v408
  %v513 = vpop.f32.mrf.mxu0
  %v514 = vadd.f32 %v354, %v513
  %v515 = vpop.f32.mrf.mxu0
  %516 = vmatprep.mubr.f32.mxu0 0.0
  %517 = vmatmul.mubr.f32.gmra.mxu0 %v411
  %v518 = vpop.f32.mrf.mxu0
  %v519 = vadd.f32 %v359, %v518
  %v520 = vpop.f32.mrf.mxu0
  %521 = vmatprep.mubr.f32.mxu0 0.0
  %522 = vmatmul.mubr.f32.gmra.mxu0 %v414
  %v523 = vpop.f32.mrf.mxu0
  %v524 = vadd.f32 %v364, %v523
  %v525 = vpop.f32.mrf.mxu0
  %526 = vmatprep.mubr.f32.mxu0 0.0
  %527 = vmatmul.mubr.f32.gmra.mxu0 %v417
  %v528 = vpop.f32.mrf.mxu0
  %v529 = vadd.f32 %v369, %v528
  %v530 = vpop.f32.mrf.mxu0
  %531 = vmatprep.mubr.f32.mxu0 0.0
  %532 = vmatmul.mubr.f32.gmra.mxu0 %v420
  %v533 = vpop.f32.mrf.mxu0
  %v534 = vadd.f32 %v374, %v533
  %v535 = vpop.f32.mrf.mxu0
  %536 = vmatprep.mubr.f32.mxu0 0.0
  %537 = vmatmul.mubr.f32.gmra.mxu0 %v423
  %v538 = vpop.f32.mrf.mxu0
  %v539 = vadd.f32 %v379, %v538
  %v540 = vpop.f32.mrf.mxu0
  %541 = vmatprep.mubr.f32.mxu0 0.0
  %542 = vmatmul.mubr.f32.gmra.mxu0 %v426
  %v543 = vpop.f32.mrf.mxu0
  %v544 = vadd.f32 %v384, %v543
  %v545 = vpop.f32.mrf.mxu0
  %546 = vmatprep.mubr.f32.mxu0 0.0
  %547 = vmatmul.mubr.f32.gmra.mxu0 %v429
  %v548 = vpop.f32.mrf.mxu0
  %v549 = vadd.f32 %v389, %v548
  %v550 = vpop.f32.mrf.mxu0
  %551 = vmatprep.mubr.f32.mxu0 0.0
  %552 = vmatmul.mubr.f32.gmra.mxu0 %v432
  %v553 = vpop.f32.mrf.mxu0
  %v554 = vadd.f32 %v394, %v553
  %v555 = vpop.f32.mrf.mxu0
  %556 = vmatprep.mubr.f32.mxu0 0.0
  %557 = vmatmul.mubr.f32.gmra.mxu0 %v435
  %v558 = vpop.f32.mrf.mxu0
  %v559 = vadd.f32 %v399, %v558
  %v560 = vpop.f32.mrf.mxu0
  %561 = vdwg.mxu0
  %v562 = vadd.f32 %v259, %v504
  %v563 = vadd.f32 %v264, %v509
  %v564 = vadd.f32 %v269, %v514
  %v565 = vadd.f32 %v274, %v519
  %v566 = vxor.u32 %v562, 2147483648
  %v567 = vxor.u32 %v563, 2147483648
  %v568 = vxor.u32 %v564, 2147483648
  %v569 = vxor.u32 %v565, 2147483648
  %v570 = vmul.f32 %v566, 1.442695
  %v571 = vpow.pop %v570
  %v572 = vmul.f32 %v567, 1.442695
  %v573 = vpow.pop %v572
  %v574 = vmul.f32 %v568, 1.442695
  %v575 = vpow.pop %v574
  %v576 = vmul.f32 %v569, 1.442695
  %v577 = vpow.pop %v576
  %v578 = vadd.f32 %v571, 1.0
  %v579 = vadd.f32 %v573, 1.0
  %v580 = vadd.f32 %v575, 1.0
  %v581 = vadd.f32 %v577, 1.0
  %v582 = vrcp.pop %v578
  %v583 = vmul.f32 1.0, %v582
  %v584 = vrcp.pop %v579
  %v585 = vmul.f32 1.0, %v584
  %v586 = vrcp.pop %v580
  %v587 = vmul.f32 1.0, %v586
  %v588 = vrcp.pop %v581
  %v589 = vmul.f32 1.0, %v588
  %v590 = vadd.f32 %v279, %v524
  %v591 = vadd.f32 %v284, %v529
  %v592 = vadd.f32 %v289, %v534
  %v593 = vadd.f32 %v294, %v539
  %v594 = vxor.u32 %v590, 2147483648
  %v595 = vxor.u32 %v591, 2147483648
  %v596 = vxor.u32 %v592, 2147483648
  %v597 = vxor.u32 %v593, 2147483648
  %v598 = vmul.f32 %v594, 1.442695
  %v599 = vpow.pop %v598
  %v600 = vmul.f32 %v595, 1.442695
  %v601 = vpow.pop %v600
  %v602 = vmul.f32 %v596, 1.442695
  %v603 = vpow.pop %v602
  %v604 = vmul.f32 %v597, 1.442695
  %v605 = vpow.pop %v604
  %v606 = vadd.f32 %v599, 1.0
  %v607 = vadd.f32 %v601, 1.0
  %v608 = vadd.f32 %v603, 1.0
  %v609 = vadd.f32 %v605, 1.0
  %v610 = vrcp.pop %v606
  %v611 = vmul.f32 1.0, %v610
  %v612 = vrcp.pop %v607
  %v613 = vmul.f32 1.0, %v612
  %v614 = vrcp.pop %v608
  %v615 = vmul.f32 1.0, %v614
  %v616 = vrcp.pop %v609
  %v617 = vmul.f32 1.0, %v616
  %v618 = vmul.f32 %v583, %v544
  %v619 = vmul.f32 %v585, %v549
  %v620 = vmul.f32 %v587, %v554
  %v621 = vmul.f32 %v589, %v559
  %v622 = vadd.f32 %v299, %v618
  %v623 = vadd.f32 %v304, %v619
  %v624 = vadd.f32 %v309, %v620
  %v625 = vadd.f32 %v314, %v621
  %v626 = vtanh.pop %v622
  %v627 = vtanh.pop %v623
  %v628 = vtanh.pop %v624
  %v629 = vtanh.pop %v625
  %v630 = vsub.f32 1.0, %v611
  %v631 = vsub.f32 1.0, %v613
  %v632 = vsub.f32 1.0, %v615
  %v633 = vsub.f32 1.0, %v617
  %v634 = vmul.f32 %v630, %v626
  %v635 = vmul.f32 %v631, %v627
  %v636 = vmul.f32 %v632, %v628
  %v637 = vmul.f32 %v633, %v629
  %v638 = vmul.f32 %v611, %v64
  %v639 = vmul.f32 %v613, %v65
  %v640 = vmul.f32 %v615, %v66
  %v641 = vmul.f32 %v617, %v67
  %v642 = vadd.f32 %v634, %v638
  %v643 = vadd.f32 %v635, %v639
  %v644 = vadd.f32 %v636, %v640
  %v645 = vadd.f32 %v637, %v641
  %vm646 = vcmask 15360
  %647 = vst.msk [vmem:[%s16] sm:$0xff] %vm646, %v642
  %648 = vst.msk [vmem:[%s16 + $0x8] sm:$0xff] %vm646, %v643
  %649 = vst.msk [vmem:[%s16 + $0x10] sm:$0xff] %vm646, %v644
  %650 = vst.msk [vmem:[%s16 + $0x18] sm:$0xff] %vm646, %v645
  %v651 = vld [vmem:[%s8] sm:$0xff]
  %v652 = vld [vmem:[%s8 + $0x8] sm:$0xff]
  %v653 = vld [vmem:[%s8 + $0x10] sm:$0xff]
  %v654 = vld [vmem:[%s8 + $0x18] sm:$0xff]
  %v656 = vsel %vm155, %v651, 0
  %v659 = vsel %vm155, %v652, 0
  %v662 = vsel %vm155, %v653, 0
  %v665 = vsel %vm155, %v654, 0
  %667 = vmatprep.subr.mxu0 0.0
  %668 = vmatpush1.msra.mxu0 0.0
  %669 = vmatprep.subr.mxu0 0.0
  %670 = vmatpush1.msra.mxu0 0.0
  %671 = vmatprep.subr.mxu0 0.0
  %672 = vmatpush1.msra.mxu0 0.0
  %673 = vmatprep.subr.mxu0 0.0
  %674 = vmatpush1.msra.mxu0 0.0
  %675 = vmatprep.subr.mxu0 0.0
  %676 = vmatpush1.msra.mxu0 0.0
  %677 = vmatprep.subr.mxu0 0.0
  %678 = vmatpush1.msra.mxu0 0.0
  %679 = vmatprep.subr.mxu0 0.0
  %680 = vmatpush1.msra.mxu0 0.0
  %681 = vmatprep.subr.mxu0 0.0
  %682 = vmatpush1.msra.mxu0 0.0
  %683 = vmatprep.subr.mxu0 0.0
  %684 = vmatpush1.msra.mxu0 0.0
  %685 = vmatprep.subr.mxu0 0.0
  %686 = vmatpush1.msra.mxu0 0.0
  %687 = vmatprep.subr.mxu0 0.0
  %688 = vmatpush1.msra.mxu0 0.0
  %689 = vmatprep.subr.mxu0 0.0
  %690 = vmatpush1.msra.mxu0 0.0
  %691 = vmatprep.subr.mxu0 0.0
  %692 = vmatpush1.msra.mxu0 %v645
  %693 = vmatprep.subr.mxu0 0.0
  %694 = vmatpush1.msra.mxu0 %v644
  %695 = vmatprep.subr.mxu0 0.0
  %696 = vmatpush1.msra.mxu0 %v643
  %697 = vmatprep.subr.mxu0 0.0
  %698 = vmatpush1.msra.mxu0 %v642
  %699 = vmatprep.subr.mxu0 0.0
  %700 = vmatpush2.msra.mxu0 0.0
  %701 = vmatprep.subr.mxu0 0.0
  %702 = vmatpush2.msra.mxu0 0.0
  %703 = vmatprep.subr.mxu0 0.0
  %704 = vmatpush2.msra.mxu0 0.0
  %705 = vmatprep.subr.mxu0 0.0
  %706 = vmatpush2.msra.mxu0 0.0
  %707 = vmatprep.subr.mxu0 0.0
  %708 = vmatpush2.msra.mxu0 0.0
  %709 = vmatprep.subr.mxu0 0.0
  %710 = vmatpush2.msra.mxu0 0.0
  %711 = vmatprep.subr.mxu0 0.0
  %712 = vmatpush2.msra.mxu0 0.0
  %713 = vmatprep.subr.mxu0 0.0
  %714 = vmatpush2.msra.mxu0 0.0
  %715 = vmatprep.subr.mxu0 0.0
  %716 = vmatpush2.msra.mxu0 0.0
  %717 = vmatprep.subr.mxu0 0.0
  %718 = vmatpush2.msra.mxu0 0.0
  %719 = vmatprep.subr.mxu0 0.0
  %720 = vmatpush2.msra.mxu0 0.0
  %721 = vmatprep.subr.mxu0 0.0
  %722 = vmatpush2.msra.mxu0 0.0
  %723 = vmatprep.subr.mxu0 0.0
  %724 = vmatpush2.msra.mxu0 0.0
  %725 = vmatprep.subr.mxu0 0.0
  %726 = vmatpush2.msra.mxu0 0.0
  %727 = vmatprep.subr.mxu0 0.0
  %728 = vmatpush2.msra.mxu0 0.0
  %729 = vmatprep.subr.mxu0 0.0
  %730 = vmatpush2.msra.mxu0 0.0
  %731 = vmatprep.mubr.f32.mxu0 0.0
  %732 = vmatmul.mubr.f32.gmra.mxu0 %v656
  %v733 = vpop.f32.mrf.mxu0
  %v734 = vadd.f32 0.0, %v733
  %v735 = vpop.f32.mrf.mxu0
  %736 = vmatprep.mubr.f32.mxu0 0.0
  %737 = vmatmul.mubr.f32.gmra.mxu0 %v659
  %v738 = vpop.f32.mrf.mxu0
  %v739 = vadd.f32 0.0, %v738
  %v740 = vpop.f32.mrf.mxu0
  %741 = vmatprep.mubr.f32.mxu0 0.0
  %742 = vmatmul.mubr.f32.gmra.mxu0 %v662
  %v743 = vpop.f32.mrf.mxu0
  %v744 = vadd.f32 0.0, %v743
  %v745 = vpop.f32.mrf.mxu0
  %746 = vmatprep.mubr.f32.mxu0 0.0
  %747 = vmatmul.mubr.f32.gmra.mxu0 %v665
  %v748 = vpop.f32.mrf.mxu0
  %v749 = vadd.f32 0.0, %v748
  %v750 = vpop.f32.mrf.mxu0
  %751 = vdwg.mxu0
  %v752 = vld [vmem:[%s7] sm:$0xff]
  %v753 = vld [vmem:[%s7 + $0x8] sm:$0xff]
  %v754 = vld [vmem:[%s7 + $0x10] sm:$0xff]
  %v755 = vld [vmem:[%s7 + $0x18] sm:$0xff]
  %v757 = vsel %vm646, %v734, 0
  %v760 = vsel %vm646, %v739, 0
  %v763 = vsel %vm646, %v744, 0
  %v766 = vsel %vm646, %v749, 0
  %vm768 = vcmask 1041408
  %v770 = vsel %vm768, %v68, 0
  %772 = vmatprep.subr.mxu0 0.0
  %773 = vmatpush1.msra.mxu0 0.0
  %774 = vmatprep.subr.mxu0 0.0
  %775 = vmatpush1.msra.mxu0 0.0
  %776 = vmatprep.subr.mxu0 0.0
  %777 = vmatpush1.msra.mxu0 0.0
  %778 = vmatprep.subr.mxu0 0.0
  %779 = vmatpush1.msra.mxu0 0.0
  %780 = vmatprep.subr.mxu0 0.0
  %781 = vmatpush1.msra.mxu0 0.0
  %782 = vmatprep.subr.mxu0 0.0
  %783 = vmatpush1.msra.mxu0 0.0
  %784 = vmatprep.subr.mxu0 0.0
  %785 = vmatpush1.msra.mxu0 0.0
  %786 = vmatprep.subr.mxu0 0.0
  %787 = vmatpush1.msra.mxu0 0.0
  %788 = vmatprep.subr.mxu0 0.0
  %789 = vmatpush1.msra.mxu0 0.0
  %790 = vmatprep.subr.mxu0 0.0
  %791 = vmatpush1.msra.mxu0 0.0
  %792 = vmatprep.subr.mxu0 0.0
  %793 = vmatpush1.msra.mxu0 0.0
  %794 = vmatprep.subr.mxu0 0.0
  %795 = vmatpush1.msra.mxu0 0.0
  %796 = vmatprep.subr.mxu0 0.0
  %797 = vmatpush1.msra.mxu0 0.0
  %798 = vmatprep.subr.mxu0 0.0
  %799 = vmatpush1.msra.mxu0 0.0
  %800 = vmatprep.subr.mxu0 0.0
  %801 = vmatpush1.msra.mxu0 0.0
  %802 = vmatprep.subr.mxu0 0.0
  %803 = vmatpush1.msra.mxu0 %v770
  %804 = vmatprep.subr.mxu0 0.0
  %805 = vmatpush2.msra.mxu0 0.0
  %806 = vmatprep.subr.mxu0 0.0
  %807 = vmatpush2.msra.mxu0 0.0
  %808 = vmatprep.subr.mxu0 0.0
  %809 = vmatpush2.msra.mxu0 0.0
  %810 = vmatprep.subr.mxu0 0.0
  %811 = vmatpush2.msra.mxu0 0.0
  %812 = vmatprep.subr.mxu0 0.0
  %813 = vmatpush2.msra.mxu0 0.0
  %814 = vmatprep.subr.mxu0 0.0
  %815 = vmatpush2.msra.mxu0 0.0
  %816 = vmatprep.subr.mxu0 0.0
  %817 = vmatpush2.msra.mxu0 0.0
  %818 = vmatprep.subr.mxu0 0.0
  %819 = vmatpush2.msra.mxu0 0.0
  %820 = vmatprep.subr.mxu0 0.0
  %821 = vmatpush2.msra.mxu0 0.0
  %822 = vmatprep.subr.mxu0 0.0
  %823 = vmatpush2.msra.mxu0 0.0
  %824 = vmatprep.subr.mxu0 0.0
  %825 = vmatpush2.msra.mxu0 0.0
  %826 = vmatprep.subr.mxu0 0.0
  %827 = vmatpush2.msra.mxu0 0.0
  %828 = vmatprep.subr.mxu0 0.0
  %829 = vmatpush2.msra.mxu0 0.0
  %830 = vmatprep.subr.mxu0 0.0
  %831 = vmatpush2.msra.mxu0 0.0
  %832 = vmatprep.subr.mxu0 0.0
  %833 = vmatpush2.msra.mxu0 0.0
  %834 = vmatprep.subr.mxu0 0.0
  %835 = vmatpush2.msra.mxu0 0.0
  %836 = vmatprep.mubr.f32.mxu0 0.0
  %837 = vmatmul.mubr.f32.gmra.mxu0 %v757
  %v838 = vpop.f32.mrf.mxu0
  %v839 = vadd.f32 0.0, %v838
  %v840 = vpop.f32.mrf.mxu0
  %841 = vmatprep.mubr.f32.mxu0 0.0
  %842 = vmatmul.mubr.f32.gmra.mxu0 %v760
  %v843 = vpop.f32.mrf.mxu0
  %v844 = vadd.f32 0.0, %v843
  %v845 = vpop.f32.mrf.mxu0
  %846 = vmatprep.mubr.f32.mxu0 0.0
  %847 = vmatmul.mubr.f32.gmra.mxu0 %v763
  %v848 = vpop.f32.mrf.mxu0
  %v849 = vadd.f32 0.0, %v848
  %v850 = vpop.f32.mrf.mxu0
  %851 = vmatprep.mubr.f32.mxu0 0.0
  %852 = vmatmul.mubr.f32.gmra.mxu0 %v766
  %v853 = vpop.f32.mrf.mxu0
  %v854 = vadd.f32 0.0, %v853
  %v855 = vpop.f32.mrf.mxu0
  %856 = vdwg.mxu0
  %vm857 = vcmask 523264
  %v859 = vsel %vm857, %v752, 0
  %v862 = vsel %vm857, %v753, 0
  %v865 = vsel %vm857, %v754, 0
  %v868 = vsel %vm857, %v755, 0
  %870 = vmatprep.subr.mxu0 0.0
  %871 = vmatpush1.msra.mxu0 0.0
  %872 = vmatprep.subr.mxu0 0.0
  %873 = vmatpush1.msra.mxu0 0.0
  %874 = vmatprep.subr.mxu0 0.0
  %875 = vmatpush1.msra.mxu0 0.0
  %876 = vmatprep.subr.mxu0 0.0
  %877 = vmatpush1.msra.mxu0 0.0
  %878 = vmatprep.subr.mxu0 0.0
  %879 = vmatpush1.msra.mxu0 0.0
  %880 = vmatprep.subr.mxu0 0.0
  %881 = vmatpush1.msra.mxu0 0.0
  %882 = vmatprep.subr.mxu0 0.0
  %883 = vmatpush1.msra.mxu0 0.0
  %884 = vmatprep.subr.mxu0 0.0
  %885 = vmatpush1.msra.mxu0 0.0
  %886 = vmatprep.subr.mxu0 0.0
  %887 = vmatpush1.msra.mxu0 %v59
  %888 = vmatprep.subr.mxu0 0.0
  %889 = vmatpush1.msra.mxu0 %v58
  %890 = vmatprep.subr.mxu0 0.0
  %891 = vmatpush1.msra.mxu0 %v57
  %892 = vmatprep.subr.mxu0 0.0
  %893 = vmatpush1.msra.mxu0 %v56
  %894 = vmatprep.subr.mxu0 0.0
  %895 = vmatpush1.msra.mxu0 %v55
  %896 = vmatprep.subr.mxu0 0.0
  %897 = vmatpush1.msra.mxu0 %v54
  %898 = vmatprep.subr.mxu0 0.0
  %899 = vmatpush1.msra.mxu0 %v53
  %900 = vmatprep.subr.mxu0 0.0
  %901 = vmatpush1.msra.mxu0 %v52
  %902 = vmatprep.subr.mxu0 0.0
  %903 = vmatpush2.msra.mxu0 0.0
  %904 = vmatprep.subr.mxu0 0.0
  %905 = vmatpush2.msra.mxu0 0.0
  %906 = vmatprep.subr.mxu0 0.0
  %907 = vmatpush2.msra.mxu0 0.0
  %908 = vmatprep.subr.mxu0 0.0
  %909 = vmatpush2.msra.mxu0 0.0
  %910 = vmatprep.subr.mxu0 0.0
  %911 = vmatpush2.msra.mxu0 0.0
  %912 = vmatprep.subr.mxu0 0.0
  %913 = vmatpush2.msra.mxu0 0.0
  %914 = vmatprep.subr.mxu0 0.0
  %915 = vmatpush2.msra.mxu0 0.0
  %916 = vmatprep.subr.mxu0 0.0
  %917 = vmatpush2.msra.mxu0 0.0
  %918 = vmatprep.subr.mxu0 0.0
  %919 = vmatpush2.msra.mxu0 0.0
  %920 = vmatprep.subr.mxu0 0.0
  %921 = vmatpush2.msra.mxu0 0.0
  %922 = vmatprep.subr.mxu0 0.0
  %923 = vmatpush2.msra.mxu0 0.0
  %924 = vmatprep.subr.mxu0 0.0
  %925 = vmatpush2.msra.mxu0 0.0
  %926 = vmatprep.subr.mxu0 0.0
  %927 = vmatpush2.msra.mxu0 0.0
  %928 = vmatprep.subr.mxu0 0.0
  %929 = vmatpush2.msra.mxu0 0.0
  %930 = vmatprep.subr.mxu0 0.0
  %931 = vmatpush2.msra.mxu0 0.0
  %932 = vmatprep.subr.mxu0 0.0
  %933 = vmatpush2.msra.mxu0 0.0
  %934 = vmatprep.mubr.f32.mxu0 0.0
  %935 = vmatmul.mubr.f32.gmra.mxu0 %v859
  %v936 = vpop.f32.mrf.mxu0
  %v937 = vadd.f32 %v839, %v936
  %v938 = vpop.f32.mrf.mxu0
  %939 = vmatprep.mubr.f32.mxu0 0.0
  %940 = vmatmul.mubr.f32.gmra.mxu0 %v862
  %v941 = vpop.f32.mrf.mxu0
  %v942 = vadd.f32 %v844, %v941
  %v943 = vpop.f32.mrf.mxu0
  %944 = vmatprep.mubr.f32.mxu0 0.0
  %945 = vmatmul.mubr.f32.gmra.mxu0 %v865
  %v946 = vpop.f32.mrf.mxu0
  %v947 = vadd.f32 %v849, %v946
  %v948 = vpop.f32.mrf.mxu0
  %949 = vmatprep.mubr.f32.mxu0 0.0
  %950 = vmatmul.mubr.f32.gmra.mxu0 %v868
  %v951 = vpop.f32.mrf.mxu0
  %v952 = vadd.f32 %v854, %v951
  %v953 = vpop.f32.mrf.mxu0
  %954 = vdwg.mxu0
  %v955 = vtanh.pop %v937
  %v956 = vtanh.pop %v942
  %v957 = vtanh.pop %v947
  %v958 = vtanh.pop %v952
  %v959 = vld [vmem:[%s9] sm:$0xff]
  %v960 = vld [vmem:[%s9 + $0x8] sm:$0xff]
  %v961 = vld [vmem:[%s9 + $0x10] sm:$0xff]
  %v962 = vld [vmem:[%s9 + $0x18] sm:$0xff]
  %964 = vset.pattern.permute.xlu0 0
  %965 = vperm.xlu0 %964, %v959
  %v966 = vpop.permute.xlu0 %965
  %969 = vset.pattern.permute.xlu0 0
  %970 = vperm.xlu0 %969, %v960
  %v971 = vpop.permute.xlu0 %970
  %974 = vset.pattern.permute.xlu0 0
  %975 = vperm.xlu0 %974, %v961
  %v976 = vpop.permute.xlu0 %975
  %979 = vset.pattern.permute.xlu0 0
  %980 = vperm.xlu0 %979, %v962
  %v981 = vpop.permute.xlu0 %980
  %v983 = vmul.f32 %v966, %v955
  %v984 = vmul.f32 %v971, %v956
  %v985 = vmul.f32 %v976, %v957
  %v986 = vmul.f32 %v981, %v958
  %vm987 = vcmask 130048
  %v988 = vsel %vm987, %v983, 0.0
  %v989 = vsel %vm987, %v984, 0.0
  %v990 = vadd.f32 %v988, %v989
  %v991 = vsel %vm987, %v985, 0.0
  %v992 = vadd.f32 %v990, %v991
  %v993 = vsel %vm987, %v986, 0.0
  %v994 = vadd.f32 %v992, %v993
  %v995 = vrot.slane %v994, 4
  %v996 = vadd.f32 %v994, %v995
  %v997 = vrot.slane %v996, 2
  %v998 = vadd.f32 %v996, %v997
  %v999 = vrot.slane %v998, 1
  %v1000 = vadd.f32 %v998, %v999
  %v1001 = vsel %vm987, %v1000, -inf
  %1002 = vmax.xlane.f32.xlu0 %v1001
  %v1003 = vpop.xlane.xlu0 %1002
  %v1004 = vsub.f32 %v1000, %v1003
  %v1005 = vmul.f32 %v1004, 1.442695
  %v1006 = vpow.pop %v1005
  %v1008 = vsel %vm987, %v1006, 0
  %1010 = vmatprep.subr.mxu0 0.0
  %1011 = vmatpush1.msra.mxu0 0.0
  %1012 = vmatprep.subr.mxu0 0.0
  %1013 = vmatpush1.msra.mxu0 0.0
  %1014 = vmatprep.subr.mxu0 0.0
  %1015 = vmatpush1.msra.mxu0 0.0
  %1016 = vmatprep.subr.mxu0 0.0
  %1017 = vmatpush1.msra.mxu0 0.0
  %1018 = vmatprep.subr.mxu0 0.0
  %1019 = vmatpush1.msra.mxu0 0.0
  %1020 = vmatprep.subr.mxu0 0.0
  %1021 = vmatpush1.msra.mxu0 0.0
  %1022 = vmatprep.subr.mxu0 0.0
  %1023 = vmatpush1.msra.mxu0 0.0
  %1024 = vmatprep.subr.mxu0 0.0
  %1025 = vmatpush1.msra.mxu0 0.0
  %1026 = vmatprep.subr.mxu0 0.0
  %1027 = vmatpush1.msra.mxu0 0.0
  %1028 = vmatprep.subr.mxu0 0.0
  %1029 = vmatpush1.msra.mxu0 0.0
  %1030 = vmatprep.subr.mxu0 0.0
  %1031 = vmatpush1.msra.mxu0 0.0
  %1032 = vmatprep.subr.mxu0 0.0
  %1033 = vmatpush1.msra.mxu0 0.0
  %1034 = vmatprep.subr.mxu0 0.0
  %1035 = vmatpush1.msra.mxu0 0.0
  %1036 = vmatprep.subr.mxu0 0.0
  %1037 = vmatpush1.msra.mxu0 0.0
  %1038 = vmatprep.subr.mxu0 0.0
  %1039 = vmatpush1.msra.mxu0 %v70
  %1040 = vmatprep.subr.mxu0 0.0
  %1041 = vmatpush1.msra.mxu0 %v69
  %1042 = vmatprep.subr.mxu0 0.0
  %1043 = vmatpush2.msra.mxu0 0.0
  %1044 = vmatprep.subr.mxu0 0.0
  %1045 = vmatpush2.msra.mxu0 0.0
  %1046 = vmatprep.subr.mxu0 0.0
  %1047 = vmatpush2.msra.mxu0 0.0
  %1048 = vmatprep.subr.mxu0 0.0
  %1049 = vmatpush2.msra.mxu0 0.0
  %1050 = vmatprep.subr.mxu0 0.0
  %1051 = vmatpush2.msra.mxu0 0.0
  %1052 = vmatprep.subr.mxu0 0.0
  %1053 = vmatpush2.msra.mxu0 0.0
  %1054 = vmatprep.subr.mxu0 0.0
  %1055 = vmatpush2.msra.mxu0 0.0
  %1056 = vmatprep.subr.mxu0 0.0
  %1057 = vmatpush2.msra.mxu0 0.0
  %1058 = vmatprep.subr.mxu0 0.0
  %1059 = vmatpush2.msra.mxu0 0.0
  %1060 = vmatprep.subr.mxu0 0.0
  %1061 = vmatpush2.msra.mxu0 0.0
  %1062 = vmatprep.subr.mxu0 0.0
  %1063 = vmatpush2.msra.mxu0 0.0
  %1064 = vmatprep.subr.mxu0 0.0
  %1065 = vmatpush2.msra.mxu0 0.0
  %1066 = vmatprep.subr.mxu0 0.0
  %1067 = vmatpush2.msra.mxu0 0.0
  %1068 = vmatprep.subr.mxu0 0.0
  %1069 = vmatpush2.msra.mxu0 0.0
  %1070 = vmatprep.subr.mxu0 0.0
  %1071 = vmatpush2.msra.mxu0 0.0
  %1072 = vmatprep.subr.mxu0 0.0
  %1073 = vmatpush2.msra.mxu0 0.0
  %1074 = vmatprep.mubr.f32.mxu0 0.0
  %1075 = vmatmul.mubr.f32.gmra.mxu0 %v1008
  %v1076 = vpop.f32.mrf.mxu0
  %v1077 = vadd.f32 0.0, %v1076
  %v1078 = vpop.f32.mrf.mxu0
  %1079 = vdwg.mxu0
  %v1080 = vmul.f32 %v52, %v1006
  %v1081 = vmul.f32 %v53, %v1006
  %v1082 = vmul.f32 %v54, %v1006
  %v1083 = vmul.f32 %v55, %v1006
  %v1085 = vsel %vm987, %v1080, 0
  %v1088 = vsel %vm987, %v1081, 0
  %v1091 = vsel %vm987, %v1082, 0
  %v1094 = vsel %vm987, %v1083, 0
  %1096 = vmatprep.subr.mxu0 0.0
  %1097 = vmatpush1.msra.mxu0 0.0
  %1098 = vmatprep.subr.mxu0 0.0
  %1099 = vmatpush1.msra.mxu0 0.0
  %1100 = vmatprep.subr.mxu0 0.0
  %1101 = vmatpush1.msra.mxu0 0.0
  %1102 = vmatprep.subr.mxu0 0.0
  %1103 = vmatpush1.msra.mxu0 0.0
  %1104 = vmatprep.subr.mxu0 0.0
  %1105 = vmatpush1.msra.mxu0 0.0
  %1106 = vmatprep.subr.mxu0 0.0
  %1107 = vmatpush1.msra.mxu0 0.0
  %1108 = vmatprep.subr.mxu0 0.0
  %1109 = vmatpush1.msra.mxu0 0.0
  %1110 = vmatprep.subr.mxu0 0.0
  %1111 = vmatpush1.msra.mxu0 0.0
  %1112 = vmatprep.subr.mxu0 0.0
  %1113 = vmatpush1.msra.mxu0 0.0
  %1114 = vmatprep.subr.mxu0 0.0
  %1115 = vmatpush1.msra.mxu0 0.0
  %1116 = vmatprep.subr.mxu0 0.0
  %1117 = vmatpush1.msra.mxu0 0.0
  %1118 = vmatprep.subr.mxu0 0.0
  %1119 = vmatpush1.msra.mxu0 0.0
  %1120 = vmatprep.subr.mxu0 0.0
  %1121 = vmatpush1.msra.mxu0 0.0
  %1122 = vmatprep.subr.mxu0 0.0
  %1123 = vmatpush1.msra.mxu0 0.0
  %1124 = vmatprep.subr.mxu0 0.0
  %1125 = vmatpush1.msra.mxu0 %v70
  %1126 = vmatprep.subr.mxu0 0.0
  %1127 = vmatpush1.msra.mxu0 %v69
  %1128 = vmatprep.subr.mxu0 0.0
  %1129 = vmatpush2.msra.mxu0 0.0
  %1130 = vmatprep.subr.mxu0 0.0
  %1131 = vmatpush2.msra.mxu0 0.0
  %1132 = vmatprep.subr.mxu0 0.0
  %1133 = vmatpush2.msra.mxu0 0.0
  %1134 = vmatprep.subr.mxu0 0.0
  %1135 = vmatpush2.msra.mxu0 0.0
  %1136 = vmatprep.subr.mxu0 0.0
  %1137 = vmatpush2.msra.mxu0 0.0
  %1138 = vmatprep.subr.mxu0 0.0
  %1139 = vmatpush2.msra.mxu0 0.0
  %1140 = vmatprep.subr.mxu0 0.0
  %1141 = vmatpush2.msra.mxu0 0.0
  %1142 = vmatprep.subr.mxu0 0.0
  %1143 = vmatpush2.msra.mxu0 0.0
  %1144 = vmatprep.subr.mxu0 0.0
  %1145 = vmatpush2.msra.mxu0 0.0
  %1146 = vmatprep.subr.mxu0 0.0
  %1147 = vmatpush2.msra.mxu0 0.0
  %1148 = vmatprep.subr.mxu0 0.0
  %1149 = vmatpush2.msra.mxu0 0.0
  %1150 = vmatprep.subr.mxu0 0.0
  %1151 = vmatpush2.msra.mxu0 0.0
  %1152 = vmatprep.subr.mxu0 0.0
  %1153 = vmatpush2.msra.mxu0 0.0
  %1154 = vmatprep.subr.mxu0 0.0
  %1155 = vmatpush2.msra.mxu0 0.0
  %1156 = vmatprep.subr.mxu0 0.0
  %1157 = vmatpush2.msra.mxu0 0.0
  %1158 = vmatprep.subr.mxu0 0.0
  %1159 = vmatpush2.msra.mxu0 0.0
  %1160 = vmatprep.mubr.f32.mxu0 0.0
  %1161 = vmatmul.mubr.f32.gmra.mxu0 %v1085
  %v1162 = vpop.f32.mrf.mxu0
  %v1163 = vadd.f32 0.0, %v1162
  %v1164 = vpop.f32.mrf.mxu0
  %1165 = vmatprep.mubr.f32.mxu0 0.0
  %1166 = vmatmul.mubr.f32.gmra.mxu0 %v1088
  %v1167 = vpop.f32.mrf.mxu0
  %v1168 = vadd.f32 0.0, %v1167
  %v1169 = vpop.f32.mrf.mxu0
  %1170 = vmatprep.mubr.f32.mxu0 0.0
  %1171 = vmatmul.mubr.f32.gmra.mxu0 %v1091
  %v1172 = vpop.f32.mrf.mxu0
  %v1173 = vadd.f32 0.0, %v1172
  %v1174 = vpop.f32.mrf.mxu0
  %1175 = vmatprep.mubr.f32.mxu0 0.0
  %1176 = vmatmul.mubr.f32.gmra.mxu0 %v1094
  %v1177 = vpop.f32.mrf.mxu0
  %v1178 = vadd.f32 0.0, %v1177
  %v1179 = vpop.f32.mrf.mxu0
  %1180 = vdwg.mxu0
  %v1181 = vrcp.pop %v1077
  %v1182 = vmul.f32 1.0, %v1181
  %v1183 = vlaneseq
  %v1184 = vshrl.u32 %v1183, 7
  %v1185 = vsub.s32 0, %v1184
  %v1186 = vrot.slane %v1182, %v1185
  %v1187 = vmul.f32 %v1163, %v1186
  %v1188 = vmul.f32 %v1168, %v1186
  %v1189 = vmul.f32 %v1173, %v1186
  %v1190 = vmul.f32 %v1178, %v1186
  %v1191 = vld [vmem:[%s11] sm:$0xff]
  %v1192 = vld [vmem:[%s11 + $0x8] sm:$0xff]
  %v1193 = vld [vmem:[%s11 + $0x10] sm:$0xff]
  %v1194 = vld [vmem:[%s11 + $0x18] sm:$0xff]
  %v1196 = vsel %vm155, %v1191, 0
  %v1199 = vsel %vm155, %v1192, 0
  %v1202 = vsel %vm155, %v1193, 0
  %v1205 = vsel %vm155, %v1194, 0
  %1207 = vmatprep.subr.mxu0 0.0
  %1208 = vmatpush1.msra.mxu0 0.0
  %1209 = vmatprep.subr.mxu0 0.0
  %1210 = vmatpush1.msra.mxu0 0.0
  %1211 = vmatprep.subr.mxu0 0.0
  %1212 = vmatpush1.msra.mxu0 0.0
  %1213 = vmatprep.subr.mxu0 0.0
  %1214 = vmatpush1.msra.mxu0 0.0
  %1215 = vmatprep.subr.mxu0 0.0
  %1216 = vmatpush1.msra.mxu0 0.0
  %1217 = vmatprep.subr.mxu0 0.0
  %1218 = vmatpush1.msra.mxu0 0.0
  %1219 = vmatprep.subr.mxu0 0.0
  %1220 = vmatpush1.msra.mxu0 0.0
  %1221 = vmatprep.subr.mxu0 0.0
  %1222 = vmatpush1.msra.mxu0 0.0
  %1223 = vmatprep.subr.mxu0 0.0
  %1224 = vmatpush1.msra.mxu0 0.0
  %1225 = vmatprep.subr.mxu0 0.0
  %1226 = vmatpush1.msra.mxu0 0.0
  %1227 = vmatprep.subr.mxu0 0.0
  %1228 = vmatpush1.msra.mxu0 0.0
  %1229 = vmatprep.subr.mxu0 0.0
  %1230 = vmatpush1.msra.mxu0 0.0
  %1231 = vmatprep.subr.mxu0 0.0
  %1232 = vmatpush1.msra.mxu0 %v1190
  %1233 = vmatprep.subr.mxu0 0.0
  %1234 = vmatpush1.msra.mxu0 %v1189
  %1235 = vmatprep.subr.mxu0 0.0
  %1236 = vmatpush1.msra.mxu0 %v1188
  %1237 = vmatprep.subr.mxu0 0.0
  %1238 = vmatpush1.msra.mxu0 %v1187
  %1239 = vmatprep.subr.mxu0 0.0
  %1240 = vmatpush2.msra.mxu0 0.0
  %1241 = vmatprep.subr.mxu0 0.0
  %1242 = vmatpush2.msra.mxu0 0.0
  %1243 = vmatprep.subr.mxu0 0.0
  %1244 = vmatpush2.msra.mxu0 0.0
  %1245 = vmatprep.subr.mxu0 0.0
  %1246 = vmatpush2.msra.mxu0 0.0
  %1247 = vmatprep.subr.mxu0 0.0
  %1248 = vmatpush2.msra.mxu0 0.0
  %1249 = vmatprep.subr.mxu0 0.0
  %1250 = vmatpush2.msra.mxu0 0.0
  %1251 = vmatprep.subr.mxu0 0.0
  %1252 = vmatpush2.msra.mxu0 0.0
  %1253 = vmatprep.subr.mxu0 0.0
  %1254 = vmatpush2.msra.mxu0 0.0
  %1255 = vmatprep.subr.mxu0 0.0
  %1256 = vmatpush2.msra.mxu0 0.0
  %1257 = vmatprep.subr.mxu0 0.0
  %1258 = vmatpush2.msra.mxu0 0.0
  %1259 = vmatprep.subr.mxu0 0.0
  %1260 = vmatpush2.msra.mxu0 0.0
  %1261 = vmatprep.subr.mxu0 0.0
  %1262 = vmatpush2.msra.mxu0 0.0
  %1263 = vmatprep.subr.mxu0 0.0
  %1264 = vmatpush2.msra.mxu0 0.0
  %1265 = vmatprep.subr.mxu0 0.0
  %1266 = vmatpush2.msra.mxu0 0.0
  %1267 = vmatprep.subr.mxu0 0.0
  %1268 = vmatpush2.msra.mxu0 0.0
  %1269 = vmatprep.subr.mxu0 0.0
  %1270 = vmatpush2.msra.mxu0 0.0
  %1271 = vmatprep.mubr.f32.mxu0 0.0
  %1272 = vmatmul.mubr.f32.gmra.mxu0 %v1196
  %v1273 = vpop.f32.mrf.mxu0
  %v1274 = vadd.f32 0.0, %v1273
  %v1275 = vpop.f32.mrf.mxu0
  %1276 = vmatprep.mubr.f32.mxu0 0.0
  %1277 = vmatmul.mubr.f32.gmra.mxu0 %v1199
  %v1278 = vpop.f32.mrf.mxu0
  %v1279 = vadd.f32 0.0, %v1278
  %v1280 = vpop.f32.mrf.mxu0
  %1281 = vmatprep.mubr.f32.mxu0 0.0
  %1282 = vmatmul.mubr.f32.gmra.mxu0 %v1202
  %v1283 = vpop.f32.mrf.mxu0
  %v1284 = vadd.f32 0.0, %v1283
  %v1285 = vpop.f32.mrf.mxu0
  %1286 = vmatprep.mubr.f32.mxu0 0.0
  %1287 = vmatmul.mubr.f32.gmra.mxu0 %v1205
  %v1288 = vpop.f32.mrf.mxu0
  %v1289 = vadd.f32 0.0, %v1288
  %v1290 = vpop.f32.mrf.mxu0
  %1291 = vdwg.mxu0
  %v1292 = vld [vmem:[%s10] sm:$0xff]
  %v1293 = vld [vmem:[%s10 + $0x8] sm:$0xff]
  %v1294 = vld [vmem:[%s10 + $0x10] sm:$0xff]
  %v1295 = vld [vmem:[%s10 + $0x18] sm:$0xff]
  %v1297 = vsel %vm646, %v1274, 0
  %v1300 = vsel %vm646, %v1279, 0
  %v1303 = vsel %vm646, %v1284, 0
  %v1306 = vsel %vm646, %v1289, 0
  %1308 = vmatprep.subr.mxu0 0.0
  %1309 = vmatpush1.msra.mxu0 0.0
  %1310 = vmatprep.subr.mxu0 0.0
  %1311 = vmatpush1.msra.mxu0 0.0
  %1312 = vmatprep.subr.mxu0 0.0
  %1313 = vmatpush1.msra.mxu0 0.0
  %1314 = vmatprep.subr.mxu0 0.0
  %1315 = vmatpush1.msra.mxu0 0.0
  %1316 = vmatprep.subr.mxu0 0.0
  %1317 = vmatpush1.msra.mxu0 0.0
  %1318 = vmatprep.subr.mxu0 0.0
  %1319 = vmatpush1.msra.mxu0 0.0
  %1320 = vmatprep.subr.mxu0 0.0
  %1321 = vmatpush1.msra.mxu0 0.0
  %1322 = vmatprep.subr.mxu0 0.0
  %1323 = vmatpush1.msra.mxu0 0.0
  %1324 = vmatprep.subr.mxu0 0.0
  %1325 = vmatpush1.msra.mxu0 0.0
  %1326 = vmatprep.subr.mxu0 0.0
  %1327 = vmatpush1.msra.mxu0 0.0
  %1328 = vmatprep.subr.mxu0 0.0
  %1329 = vmatpush1.msra.mxu0 0.0
  %1330 = vmatprep.subr.mxu0 0.0
  %1331 = vmatpush1.msra.mxu0 0.0
  %1332 = vmatprep.subr.mxu0 0.0
  %1333 = vmatpush1.msra.mxu0 0.0
  %1334 = vmatprep.subr.mxu0 0.0
  %1335 = vmatpush1.msra.mxu0 0.0
  %1336 = vmatprep.subr.mxu0 0.0
  %1337 = vmatpush1.msra.mxu0 0.0
  %1338 = vmatprep.subr.mxu0 0.0
  %1339 = vmatpush1.msra.mxu0 %v770
  %1340 = vmatprep.subr.mxu0 0.0
  %1341 = vmatpush2.msra.mxu0 0.0
  %1342 = vmatprep.subr.mxu0 0.0
  %1343 = vmatpush2.msra.mxu0 0.0
  %1344 = vmatprep.subr.mxu0 0.0
  %1345 = vmatpush2.msra.mxu0 0.0
  %1346 = vmatprep.subr.mxu0 0.0
  %1347 = vmatpush2.msra.mxu0 0.0
  %1348 = vmatprep.subr.mxu0 0.0
  %1349 = vmatpush2.msra.mxu0 0.0
  %1350 = vmatprep.subr.mxu0 0.0
  %1351 = vmatpush2.msra.mxu0 0.0
  %1352 = vmatprep.subr.mxu0 0.0
  %1353 = vmatpush2.msra.mxu0 0.0
  %1354 = vmatprep.subr.mxu0 0.0
  %1355 = vmatpush2.msra.mxu0 0.0
  %1356 = vmatprep.subr.mxu0 0.0
  %1357 = vmatpush2.msra.mxu0 0.0
  %1358 = vmatprep.subr.mxu0 0.0
  %1359 = vmatpush2.msra.mxu0 0.0
  %1360 = vmatprep.subr.mxu0 0.0
  %1361 = vmatpush2.msra.mxu0 0.0
  %1362 = vmatprep.subr.mxu0 0.0
  %1363 = vmatpush2.msra.mxu0 0.0
  %1364 = vmatprep.subr.mxu0 0.0
  %1365 = vmatpush2.msra.mxu0 0.0
  %1366 = vmatprep.subr.mxu0 0.0
  %1367 = vmatpush2.msra.mxu0 0.0
  %1368 = vmatprep.subr.mxu0 0.0
  %1369 = vmatpush2.msra.mxu0 0.0
  %1370 = vmatprep.subr.mxu0 0.0
  %1371 = vmatpush2.msra.mxu0 0.0
  %1372 = vmatprep.mubr.f32.mxu0 0.0
  %1373 = vmatmul.mubr.f32.gmra.mxu0 %v1297
  %v1374 = vpop.f32.mrf.mxu0
  %v1375 = vadd.f32 0.0, %v1374
  %v1376 = vpop.f32.mrf.mxu0
  %1377 = vmatprep.mubr.f32.mxu0 0.0
  %1378 = vmatmul.mubr.f32.gmra.mxu0 %v1300
  %v1379 = vpop.f32.mrf.mxu0
  %v1380 = vadd.f32 0.0, %v1379
  %v1381 = vpop.f32.mrf.mxu0
  %1382 = vmatprep.mubr.f32.mxu0 0.0
  %1383 = vmatmul.mubr.f32.gmra.mxu0 %v1303
  %v1384 = vpop.f32.mrf.mxu0
  %v1385 = vadd.f32 0.0, %v1384
  %v1386 = vpop.f32.mrf.mxu0
  %1387 = vmatprep.mubr.f32.mxu0 0.0
  %1388 = vmatmul.mubr.f32.gmra.mxu0 %v1306
  %v1389 = vpop.f32.mrf.mxu0
  %v1390 = vadd.f32 0.0, %v1389
  %v1391 = vpop.f32.mrf.mxu0
  %1392 = vdwg.mxu0
  %v1394 = vsel %vm155, %v1292, 0
  %v1397 = vsel %vm155, %v1293, 0
  %v1400 = vsel %vm155, %v1294, 0
  %v1403 = vsel %vm155, %v1295, 0
  %1405 = vmatprep.subr.mxu0 0.0
  %1406 = vmatpush1.msra.mxu0 0.0
  %1407 = vmatprep.subr.mxu0 0.0
  %1408 = vmatpush1.msra.mxu0 0.0
  %1409 = vmatprep.subr.mxu0 0.0
  %1410 = vmatpush1.msra.mxu0 0.0
  %1411 = vmatprep.subr.mxu0 0.0
  %1412 = vmatpush1.msra.mxu0 0.0
  %1413 = vmatprep.subr.mxu0 0.0
  %1414 = vmatpush1.msra.mxu0 0.0
  %1415 = vmatprep.subr.mxu0 0.0
  %1416 = vmatpush1.msra.mxu0 0.0
  %1417 = vmatprep.subr.mxu0 0.0
  %1418 = vmatpush1.msra.mxu0 0.0
  %1419 = vmatprep.subr.mxu0 0.0
  %1420 = vmatpush1.msra.mxu0 0.0
  %1421 = vmatprep.subr.mxu0 0.0
  %1422 = vmatpush1.msra.mxu0 0.0
  %1423 = vmatprep.subr.mxu0 0.0
  %1424 = vmatpush1.msra.mxu0 0.0
  %1425 = vmatprep.subr.mxu0 0.0
  %1426 = vmatpush1.msra.mxu0 0.0
  %1427 = vmatprep.subr.mxu0 0.0
  %1428 = vmatpush1.msra.mxu0 0.0
  %1429 = vmatprep.subr.mxu0 0.0
  %1430 = vmatpush1.msra.mxu0 %v55
  %1431 = vmatprep.subr.mxu0 0.0
  %1432 = vmatpush1.msra.mxu0 %v54
  %1433 = vmatprep.subr.mxu0 0.0
  %1434 = vmatpush1.msra.mxu0 %v53
  %1435 = vmatprep.subr.mxu0 0.0
  %1436 = vmatpush1.msra.mxu0 %v52
  %1437 = vmatprep.subr.mxu0 0.0
  %1438 = vmatpush2.msra.mxu0 0.0
  %1439 = vmatprep.subr.mxu0 0.0
  %1440 = vmatpush2.msra.mxu0 0.0
  %1441 = vmatprep.subr.mxu0 0.0
  %1442 = vmatpush2.msra.mxu0 0.0
  %1443 = vmatprep.subr.mxu0 0.0
  %1444 = vmatpush2.msra.mxu0 0.0
  %1445 = vmatprep.subr.mxu0 0.0
  %1446 = vmatpush2.msra.mxu0 0.0
  %1447 = vmatprep.subr.mxu0 0.0
  %1448 = vmatpush2.msra.mxu0 0.0
  %1449 = vmatprep.subr.mxu0 0.0
  %1450 = vmatpush2.msra.mxu0 0.0
  %1451 = vmatprep.subr.mxu0 0.0
  %1452 = vmatpush2.msra.mxu0 0.0
  %1453 = vmatprep.subr.mxu0 0.0
  %1454 = vmatpush2.msra.mxu0 0.0
  %1455 = vmatprep.subr.mxu0 0.0
  %1456 = vmatpush2.msra.mxu0 0.0
  %1457 = vmatprep.subr.mxu0 0.0
  %1458 = vmatpush2.msra.mxu0 0.0
  %1459 = vmatprep.subr.mxu0 0.0
  %1460 = vmatpush2.msra.mxu0 0.0
  %1461 = vmatprep.subr.mxu0 0.0
  %1462 = vmatpush2.msra.mxu0 0.0
  %1463 = vmatprep.subr.mxu0 0.0
  %1464 = vmatpush2.msra.mxu0 0.0
  %1465 = vmatprep.subr.mxu0 0.0
  %1466 = vmatpush2.msra.mxu0 0.0
  %1467 = vmatprep.subr.mxu0 0.0
  %1468 = vmatpush2.msra.mxu0 0.0
  %1469 = vmatprep.mubr.f32.mxu0 0.0
  %1470 = vmatmul.mubr.f32.gmra.mxu0 %v1394
  %v1471 = vpop.f32.mrf.mxu0
  %v1472 = vadd.f32 %v1375, %v1471
  %v1473 = vpop.f32.mrf.mxu0
  %1474 = vmatprep.mubr.f32.mxu0 0.0
  %1475 = vmatmul.mubr.f32.gmra.mxu0 %v1397
  %v1476 = vpop.f32.mrf.mxu0
  %v1477 = vadd.f32 %v1380, %v1476
  %v1478 = vpop.f32.mrf.mxu0
  %1479 = vmatprep.mubr.f32.mxu0 0.0
  %1480 = vmatmul.mubr.f32.gmra.mxu0 %v1400
  %v1481 = vpop.f32.mrf.mxu0
  %v1482 = vadd.f32 %v1385, %v1481
  %v1483 = vpop.f32.mrf.mxu0
  %1484 = vmatprep.mubr.f32.mxu0 0.0
  %1485 = vmatmul.mubr.f32.gmra.mxu0 %v1403
  %v1486 = vpop.f32.mrf.mxu0
  %v1487 = vadd.f32 %v1390, %v1486
  %v1488 = vpop.f32.mrf.mxu0
  %1489 = vdwg.mxu0
  %v1490 = vtanh.pop %v1472
  %v1491 = vtanh.pop %v1477
  %v1492 = vtanh.pop %v1482
  %v1493 = vtanh.pop %v1487
  %v1494 = vld [vmem:[%s12] sm:$0xff]
  %v1495 = vld [vmem:[%s12 + $0x8] sm:$0xff]
  %v1496 = vld [vmem:[%s12 + $0x10] sm:$0xff]
  %v1497 = vld [vmem:[%s12 + $0x18] sm:$0xff]
  %1499 = vset.pattern.permute.xlu0 0
  %1500 = vperm.xlu0 %1499, %v1494
  %v1501 = vpop.permute.xlu0 %1500
  %1504 = vset.pattern.permute.xlu0 0
  %1505 = vperm.xlu0 %1504, %v1495
  %v1506 = vpop.permute.xlu0 %1505
  %1509 = vset.pattern.permute.xlu0 0
  %1510 = vperm.xlu0 %1509, %v1496
  %v1511 = vpop.permute.xlu0 %1510
  %1514 = vset.pattern.permute.xlu0 0
  %1515 = vperm.xlu0 %1514, %v1497
  %v1516 = vpop.permute.xlu0 %1515
  %v1518 = vmul.f32 %v1501, %v1490
  %v1519 = vmul.f32 %v1506, %v1491
  %v1520 = vmul.f32 %v1511, %v1492
  %v1521 = vmul.f32 %v1516, %v1493
  %v1522 = vsel %vm987, %v1518, 0.0
  %v1523 = vsel %vm987, %v1519, 0.0
  %v1524 = vadd.f32 %v1522, %v1523
  %v1525 = vsel %vm987, %v1520, 0.0
  %v1526 = vadd.f32 %v1524, %v1525
  %v1527 = vsel %vm987, %v1521, 0.0
  %v1528 = vadd.f32 %v1526, %v1527
  %v1529 = vrot.slane %v1528, 4
  %v1530 = vadd.f32 %v1528, %v1529
  %v1531 = vrot.slane %v1530, 2
  %v1532 = vadd.f32 %v1530, %v1531
  %v1533 = vrot.slane %v1532, 1
  %v1534 = vadd.f32 %v1532, %v1533
  %vm1535 = vcmask 122880
  %1536 = vst.msk [vmem:[%s15] sm:$0x1] %vm1535, %v1534
  // Predicated region
  $region62: #{pointer_forward.1} parent=0 // pred_check
    _
  $region63: #{pointer_forward.1} parent=0 // pred_check_branch
    %1538 = sbr.rel (0) target = $region65
  $region64: #{pointer_forward.1} parent=0 // pred_region
    _
  $region65: #{pointer_forward.1} parent=0 // pred_fallthru
    _
  // Predicated region
  $region66: #{pointer_forward.1} parent=0 // pred_check
    _
  $region67: #{pointer_forward.1} parent=0 // pred_check_branch
    %1540 = sbr.rel (0) target = $region69
  $region68: #{pointer_forward.1} parent=0 // pred_region
    _
  $region69: #{pointer_forward.1} parent=0 // pred_fallthru
    _
  // Predicated region
  $region70: #{pointer_forward.1} parent=0 // pred_check
    _
  $region71: #{pointer_forward.1} parent=0 // pred_check_branch
    %1542 = sbr.rel (0) target = $region73
  $region72: #{pointer_forward.1} parent=0 // pred_region
    _
  $region73: #{pointer_forward.1} parent=0 // pred_fallthru
    _
  // Predicated region
  $region74: #{pointer_forward.1} parent=0 // pred_check
    _
  $region75: #{pointer_forward.1} parent=0 // pred_check_branch
    %1544 = sbr.rel (0) target = $region77
  $region76: #{pointer_forward.1} parent=0 // pred_region
    _
  $region77: #{pointer_forward.1} parent=0 // pred_fallthru
    _

</llo_original>
